<compile_context>
chip_gen: v7x
topology: tpu7x:2x2x1
jax: 0.10.0
libtpu: 0.0.40
codegen_flags: <defaults>
</compile_context>

<pallas_src>
import functools

import jax
import jax.numpy as jnp
from jax import lax
from jax.experimental import pallas as pl
from jax.experimental.pallas import tpu as pltpu

OUT_HW = 224  # fixed by the module's F.upsample target


# ----------------------------------------------------------------------------- kernel
def fused_kernel(obj_ref, segm_ref, we_ref, be_ref, w1e_ref, b1_ref,
                 w1s_ref, w2_ref, b2_ref, ia_ref, ib_ref, out_ref,
                 *, separable, H, W):
    # obj_ref  : (1, bb, wordvec) bf16     segm_ref : (bb, seg, HW) bf16
    # we_ref   : (jemb, wordvec) bf16      be_ref   : (jemb, 1) f32
    # w1e_ref  : (jemb, jemb)  bf16        b1_ref   : (jemb, 1) f32
    # w1s_ref  : (jemb, seg)   bf16        w2_ref   : (jemb, 1) f32
    # b2_ref   : (1,) f32 in SMEM
    # separable: ia_ref = Rh (224, H) f32,          ib_ref = Rw^T (W, 224) f32
    # fused    : ia_ref = Rh_rep (224, HW) f32,     ib_ref = Rw^T tiled (HW, 224) f32
    # out_ref  : (bb, 224, 224) f32
    bb = out_ref.shape[0]
    f32 = jnp.float32

    # ---- obj_embed (Linear + folded BN1d) + ReLU, column-wise -> (jemb, bb) ----
    obj = obj_ref[0]                                                     # (bb, wordvec) bf16
    embT = lax.dot_general(we_ref[...], obj,
                           dimension_numbers=(((1,), (1,)), ((), ())),
                           preferred_element_type=f32)                   # (jemb, bb)
    embT = jnp.maximum(embT + be_ref[...], 0.0)
    # embedding contribution of the folded 1x1 conv (rank-1 over pixels)
    cT = jnp.dot(w1e_ref[...], embT.astype(jnp.bfloat16),
                 preferred_element_type=f32) + b1_ref[...]               # (jemb, bb) f32

    # ---- conv1 (seg part) for the whole batch block: one batched bf16 MXU matmul ----
    w1s_b = jnp.broadcast_to(w1s_ref[...], (bb,) + w1s_ref.shape)        # (bb, jemb, seg) bf16
    h_raw = jnp.einsum('bjs,bsp->bjp', w1s_b, segm_ref[...],
                       preferred_element_type=f32)                       # (bb, jemb, HW) f32

    w2 = w2_ref[...]                                                     # (jemb, 1) f32
    b2 = b2_ref[0]                                                       # SMEM scalar
    ia = ia_ref[...]
    ib = ib_ref[...]

    # Small static epilogue per item (bb <= 4): bias+ReLU, w2 reduce, 2 tiny matmuls, store.
    for b in range(bb):
        hb = jnp.maximum(h_raw[b] + cT[:, b:b + 1], 0.0)                 # (jemb, HW) f32
        # Conv2 (jemb -> 1): VPU multiply + sublane reduce, stays lane-dense
        score = jnp.sum(hb * w2, axis=0, keepdims=True)                  # (1, HW) f32
        if separable:
            # out = Rh @ S @ Rw^T (align_corners bilinear), b2 added after (rows sum to 1)
            t = jnp.dot(score.reshape(H, W), ib,
                        preferred_element_type=f32)                      # (H, 224)
            out_ref[b] = jnp.dot(ia, t, preferred_element_type=f32) + b2
        else:
            # small-HW fused form: out = (Rh_rep * score) @ RwT_tile == Rh @ S @ Rw^T
            out_ref[b] = jnp.dot(ia * score, ib,
                                 preferred_element_type=f32) + b2


# ----------------------------------------------------------------------------- glue
def bilinear_matrix(in_size, out_size):
    """Interpolation matrix R (out_size, in_size) for align_corners=True bilinear."""
    if in_size == 1:
        return jnp.ones((out_size, 1), jnp.float32)
    src = jnp.arange(out_size, dtype=jnp.float32) * (in_size - 1) / (out_size - 1)
    i0 = jnp.clip(jnp.floor(src).astype(jnp.int32), 0, in_size - 2)
    i1 = i0 + 1
    frac = src - i0.astype(jnp.float32)
    oh0 = jax.nn.one_hot(i0, in_size, dtype=jnp.float32)
    oh1 = jax.nn.one_hot(i1, in_size, dtype=jnp.float32)
    return (1.0 - frac)[:, None] * oh0 + frac[:, None] * oh1


def init_params(key, wordvec_dim, seg_dim, jemb_dim):
    ks = jax.random.split(key, 12)
    p = {
        # obj_embed: Linear + BatchNorm1d
        "w_lin": 0.1 * jax.random.normal(ks[0], (jemb_dim, wordvec_dim), jnp.float32),
        "b_lin": 0.1 * jax.random.normal(ks[1], (jemb_dim,), jnp.float32),
        "bn1_g": 1.0 + 0.1 * jax.random.normal(ks[2], (jemb_dim,), jnp.float32),
        "bn1_b": 0.1 * jax.random.normal(ks[3], (jemb_dim,), jnp.float32),
        "bn1_m": 0.1 * jax.random.normal(ks[4], (jemb_dim,), jnp.float32),
        "bn1_v": jax.random.uniform(ks[5], (jemb_dim,), jnp.float32, 0.5, 1.5),
        # attn_fuse: Conv2d(seg+jemb -> jemb, 1x1) + BatchNorm2d + Conv2d(jemb -> 1, 1x1)
        "w_c1": 0.1 * jax.random.normal(ks[6], (jemb_dim, seg_dim + jemb_dim), jnp.float32),
        "b_c1": 0.1 * jax.random.normal(ks[7], (jemb_dim,), jnp.float32),
        "bn2_g": 1.0 + 0.1 * jax.random.normal(ks[8], (jemb_dim,), jnp.float32),
        "bn2_b": 0.1 * jax.random.normal(ks[9], (jemb_dim,), jnp.float32),
        "bn2_m": 0.1 * jax.random.normal(ks[10], (jemb_dim,), jnp.float32),
        "bn2_v": jax.random.uniform(ks[11], (jemb_dim,), jnp.float32, 0.5, 1.5),
        "w_c2": 0.1 * jax.random.normal(jax.random.fold_in(key, 99), (1, jemb_dim), jnp.float32),
        "b_c2": 0.1 * jax.random.normal(jax.random.fold_in(key, 100), (1,), jnp.float32),
    }
    return p


def fold_params(p, seg_dim):
    """Fold eval-mode BatchNorm into the adjacent linear/conv weights ((out, in) layout)."""
    eps = 1e-5
    s1 = p["bn1_g"] / jnp.sqrt(p["bn1_v"] + eps)
    we = p["w_lin"] * s1[:, None]                                  # (jemb, wordvec)
    be = ((p["b_lin"] - p["bn1_m"]) * s1 + p["bn1_b"])[:, None]    # (jemb, 1)
    s2 = p["bn2_g"] / jnp.sqrt(p["bn2_v"] + eps)
    w1f = p["w_c1"] * s2[:, None]                                  # (jemb, seg+jemb)
    b1 = ((p["b_c1"] - p["bn2_m"]) * s2 + p["bn2_b"])[:, None]     # (jemb, 1)
    w1s = w1f[:, :seg_dim]                                         # (jemb, seg)
    w1e = w1f[:, seg_dim:]                                         # (jemb, jemb)
    w2 = p["w_c2"].T                                               # (jemb, 1)
    b2 = p["b_c2"].reshape(1, 1)                                   # (1, 1)
    return we, be, w1e, b1, w1s, w2, b2


def _pick_batch_block(n, max_block):
    """Largest divisor of n <= max_block, preferring >= 2 grid steps (megacore)."""
    divisors = [d for d in range(1, min(n, max_block) + 1) if n % d == 0]
    two_step = [d for d in divisors if n // d >= 2]
    return max(two_step) if two_step else max(divisors)


def phrase_guided_segmentation(obj_phrase, segm_feats, params,
                               max_block=4, separable_min_hw=512):
    """obj_phrase: (n, wordvec) f32; segm_feats: (n, seg, H, W) f32 (NCHW, like PyTorch).
    Returns (n, 224, 224) logits (before sigmoid).
    max_block: items per grid step. 4 is a good v5e/v6e default; use 1-2 on v7x (64 MiB VMEM).
    """
    n, seg_dim, H, W = segm_feats.shape
    wordvec_dim = obj_phrase.shape[1]
    we, be, w1e, b1, w1s, w2, b2 = fold_params(params, seg_dim)
    jemb_dim = we.shape[0]
    hw = H * W
    separable = hw >= separable_min_hw   # separable Rh@S@Rw^T for real sizes, fused for tiny HW

    bb = _pick_batch_block(n, max_block)

    # free reshape + bf16 cast of the MXU operands (cast fuses with the upstream producer)
    segm_flat = segm_feats.reshape(n, seg_dim, hw).astype(jnp.bfloat16)   # (n, seg, HW)
    obj_blocks = obj_phrase.reshape(n // bb, bb, wordvec_dim).astype(jnp.bfloat16)
    we_bf = we.astype(jnp.bfloat16)
    w1e_bf = w1e.astype(jnp.bfloat16)
    w1s_bf = w1s.astype(jnp.bfloat16)
    b2_s = b2.reshape((1,))                                               # SMEM scalar

    # align_corners bilinear interpolation matrices (kept f32: tiny FLOP share, exact output)
    rh = bilinear_matrix(H, OUT_HW)                                       # (224, H)
    rw = bilinear_matrix(W, OUT_HW)                                       # (224, W)
    if separable:
        ia = rh                                                           # (224, H)
        ib = rw.T                                                         # (W, 224)
    else:
        ia = jnp.repeat(rh, W, axis=1)                                    # (224, HW): col p -> rh[:, p//W]
        ib = jnp.tile(rw.T, (H, 1))                                       # (HW, 224): row p -> rw[:, p%W]

    kernel = functools.partial(fused_kernel, separable=separable, H=H, W=W)

    out = pl.pallas_call(
        kernel,
        out_shape=jax.ShapeDtypeStruct((n, OUT_HW, OUT_HW), jnp.float32),
        grid=(n // bb,),
        in_specs=[
            pl.BlockSpec((1, bb, wordvec_dim), lambda i: (i, 0, 0)),
            pl.BlockSpec((bb, seg_dim, hw), lambda i: (i, 0, 0)),
            pl.BlockSpec((jemb_dim, wordvec_dim), lambda i: (0, 0)),
            pl.BlockSpec((jemb_dim, 1), lambda i: (0, 0)),
            pl.BlockSpec((jemb_dim, jemb_dim), lambda i: (0, 0)),
            pl.BlockSpec((jemb_dim, 1), lambda i: (0, 0)),
            pl.BlockSpec((jemb_dim, seg_dim), lambda i: (0, 0)),
            pl.BlockSpec((jemb_dim, 1), lambda i: (0, 0)),
            pl.BlockSpec(memory_space=pltpu.MemorySpace.SMEM),            # b2 scalar
            pl.BlockSpec(ia.shape, lambda i: (0, 0)),
            pl.BlockSpec(ib.shape, lambda i: (0, 0)),
        ],
        out_specs=pl.BlockSpec((bb, OUT_HW, OUT_HW), lambda i: (i, 0, 0)),
        compiler_params=pltpu.CompilerParams(
            dimension_semantics=("parallel",),
            vmem_limit_bytes=64 * 1024 * 1024),
    )(obj_blocks, segm_flat, we_bf, be, w1e_bf, b1, w1s_bf, w2, b2_s, ia, ib)
    return out


def reference(obj_phrase, segm_feats, params):
    """Pure-JAX f32 reference (same math, no Pallas) for a correctness check."""
    n, seg_dim, H, W = segm_feats.shape
    we, be, w1e, b1, w1s, w2, b2 = fold_params(params, seg_dim)
    hp = lax.Precision.HIGHEST
    emb = jnp.maximum(jnp.matmul(obj_phrase, we.T, precision=hp) + be[:, 0], 0.0)   # (n, jemb)
    c = jnp.matmul(emb, w1e.T, precision=hp) + b1[:, 0]                             # (n, jemb)
    x = jnp.transpose(segm_feats, (0, 2, 3, 1)).reshape(n, H * W, seg_dim)
    h = jnp.maximum(jnp.matmul(x, w1s.T, precision=hp) + c[:, None, :], 0.0)        # (n, HW, jemb)
    s = jnp.matmul(h, w2, precision=hp)[..., 0] + b2[0, 0]                          # (n, HW)
    smap = s.reshape(n, H, W)
    rh = bilinear_matrix(H, OUT_HW)
    rw = bilinear_matrix(W, OUT_HW)
    return jnp.einsum("oh,nhw,pw->nop", rh, smap, rw, precision=hp)


# ----------------------------------------------------------------------------- main
if __name__ == "__main__":
    # Small shapes consistent with the module's structure (real module: 300/191/256, H=W~56).
    batch, wordvec_dim, seg_dim, jemb_dim, H, W = 4, 32, 24, 32, 16, 16

    key = jax.random.PRNGKey(0)
    k_obj, k_seg, k_par = jax.random.split(key, 3)
    obj_phrase = jax.random.normal(k_obj, (batch, wordvec_dim), jnp.float32)
    segm_feats = jax.random.normal(k_seg, (batch, seg_dim, H, W), jnp.float32)  # NCHW
    params = init_params(k_par, wordvec_dim, seg_dim, jemb_dim)

    ref = jax.block_until_ready(reference(obj_phrase, segm_feats, params))

    # Default config: toy HW=256 < 512 -> fused small-HW upsample path.
    fwd = jax.jit(phrase_guided_segmentation)
    out = jax.block_until_ready(fwd(obj_phrase, segm_feats, params))
    assert out.shape == (batch, OUT_HW, OUT_HW), out.shape
    # bf16 MXU operands -> relaxed tolerance vs the f32 reference
    assert jnp.allclose(out, ref, rtol=2e-2, atol=2e-2), float(jnp.max(jnp.abs(out - ref)))

    # Also exercise the separable (real feature-map size) upsample path.
    fwd_sep = jax.jit(functools.partial(phrase_guided_segmentation, separable_min_hw=1))
    out_sep = jax.block_until_ready(fwd_sep(obj_phrase, segm_feats, params))
    assert out_sep.shape == (batch, OUT_HW, OUT_HW), out_sep.shape
    assert jnp.allclose(out_sep, ref, rtol=2e-2, atol=2e-2), float(jnp.max(jnp.abs(out_sep - ref)))

    print("KERNEL_OK")
</pallas_src>

<mosaic_0001>
module attributes {stable_mosaic.version = 11 : i64} {
  func.func @fused_kernel(%arg0: i32, %arg1: memref<1x2x32xbf16, #tpu.memory_space<vmem>>, %arg2: memref<2x24x256xbf16, #tpu.memory_space<vmem>>, %arg3: memref<32x32xbf16, #tpu.memory_space<vmem>>, %arg4: memref<32x1xf32, #tpu.memory_space<vmem>>, %arg5: memref<32x32xbf16, #tpu.memory_space<vmem>>, %arg6: memref<32x1xf32, #tpu.memory_space<vmem>>, %arg7: memref<32x24xbf16, #tpu.memory_space<vmem>>, %arg8: memref<32x1xf32, #tpu.memory_space<vmem>>, %arg9: memref<1xf32, #tpu.memory_space<smem>>, %arg10: memref<224x256xf32, #tpu.memory_space<vmem>>, %arg11: memref<256x224xf32, #tpu.memory_space<vmem>>, %arg12: memref<2x224x224xf32, #tpu.memory_space<vmem>>) attributes {dimension_semantics = [#tpu.dimension_semantics<parallel>], iteration_bounds = array<i64: 2>, scalar_prefetch = 0 : i64, scratch_operands = 0 : i64, tpu.core_type = #tpu.core_type<tc>, window_params = [{transform_indices = @transform_0, window_bounds = array<i64: 1, 2, 32>}, {transform_indices = @transform_1, window_bounds = array<i64: 2, 24, 256>}, {pipeline_mode = #tpu.pipeline_mode<synchronous>, transform_indices = @transform_2, window_bounds = array<i64: 32, 32>}, {pipeline_mode = #tpu.pipeline_mode<synchronous>, transform_indices = @transform_3, window_bounds = array<i64: 32, 1>}, {pipeline_mode = #tpu.pipeline_mode<synchronous>, transform_indices = @transform_4, window_bounds = array<i64: 32, 32>}, {pipeline_mode = #tpu.pipeline_mode<synchronous>, transform_indices = @transform_5, window_bounds = array<i64: 32, 1>}, {pipeline_mode = #tpu.pipeline_mode<synchronous>, transform_indices = @transform_6, window_bounds = array<i64: 32, 24>}, {pipeline_mode = #tpu.pipeline_mode<synchronous>, transform_indices = @transform_7, window_bounds = array<i64: 32, 1>}, {transform_indices = @transform_8, window_bounds = array<i64: 1>}, {pipeline_mode = #tpu.pipeline_mode<synchronous>, transform_indices = @transform_9, window_bounds = array<i64: 224, 256>}, {pipeline_mode = #tpu.pipeline_mode<synchronous>, transform_indices = @transform_10, window_bounds = array<i64: 256, 224>}, {transform_indices = @transform_11, window_bounds = array<i64: 2, 224, 224>}]} {
    %c0 = arith.constant 0 : index
    %c0_0 = arith.constant 0 : index
    %c0_1 = arith.constant 0 : index
    %0 = vector.load %arg1[%c0, %c0_0, %c0_1] : memref<1x2x32xbf16, #tpu.memory_space<vmem>>, vector<1x2x32xbf16>
    %1 = vector.shape_cast %0 : vector<1x2x32xbf16> to vector<2x32xbf16>
    %c0_2 = arith.constant 0 : index
    %c0_3 = arith.constant 0 : index
    %2 = vector.load %arg3[%c0_2, %c0_3] : memref<32x32xbf16, #tpu.memory_space<vmem>>, vector<32x32xbf16>
    %cst = arith.constant dense<0.000000e+00> : vector<32x2xf32>
    %3 = tpu.matmul %2, %1, %cst {dimension_numbers = #tpu.dot_dimension_numbers<[1], [1], [0], [0], [0, 0, 1, 0], [], []>} : vector<32x32xbf16>, vector<2x32xbf16>, vector<32x2xf32> -> vector<32x2xf32>
    %c0_4 = arith.constant 0 : index
    %c0_5 = arith.constant 0 : index
    %4 = vector.load %arg4[%c0_4, %c0_5] : memref<32x1xf32, #tpu.memory_space<vmem>>, vector<32x1xf32>
    %5 = vector.broadcast %4 : vector<32x1xf32> to vector<32x2xf32>
    %6 = arith.addf %3, %5 : vector<32x2xf32>
    %cst_6 = arith.constant 0.000000e+00 : f32
    %7 = vector.broadcast %cst_6 : f32 to vector<32x2xf32>
    %8 = arith.maximumf %6, %7 : vector<32x2xf32>
    %c0_7 = arith.constant 0 : index
    %c0_8 = arith.constant 0 : index
    %9 = vector.load %arg5[%c0_7, %c0_8] : memref<32x32xbf16, #tpu.memory_space<vmem>>, vector<32x32xbf16>
    %10 = arith.truncf %8 : vector<32x2xf32> to vector<32x2xbf16>
    %cst_9 = arith.constant dense<0.000000e+00> : vector<32x2xf32>
    %11 = tpu.matmul %9, %10, %cst_9 {dimension_numbers = #tpu.dot_dimension_numbers<[1], [0], [0], [1], [0, 0, 1, 1], [], []>} : vector<32x32xbf16>, vector<32x2xbf16>, vector<32x2xf32> -> vector<32x2xf32>
    %c0_10 = arith.constant 0 : index
    %c0_11 = arith.constant 0 : index
    %12 = vector.load %arg6[%c0_10, %c0_11] : memref<32x1xf32, #tpu.memory_space<vmem>>, vector<32x1xf32>
    %13 = vector.broadcast %12 : vector<32x1xf32> to vector<32x2xf32>
    %14 = arith.addf %11, %13 : vector<32x2xf32>
    %c0_12 = arith.constant 0 : index
    %c0_13 = arith.constant 0 : index
    %15 = vector.load %arg7[%c0_12, %c0_13] : memref<32x24xbf16, #tpu.memory_space<vmem>>, vector<32x24xbf16>
    %16 = vector.shape_cast %15 : vector<32x24xbf16> to vector<1x32x24xbf16>
    %17 = vector.broadcast %16 : vector<1x32x24xbf16> to vector<2x32x24xbf16>
    %c0_14 = arith.constant 0 : index
    %c0_15 = arith.constant 0 : index
    %c0_16 = arith.constant 0 : index
    %18 = vector.load %arg2[%c0_14, %c0_15, %c0_16] : memref<2x24x256xbf16, #tpu.memory_space<vmem>>, vector<2x24x256xbf16>
    "tpu.trace_start"() <{level = 10 : i32, message = "bjs,bsp->bjp"}> : () -> ()
    %cst_17 = arith.constant dense<0.000000e+00> : vector<2x32x256xf32>
    %19 = tpu.matmul %17, %18, %cst_17 {dimension_numbers = #tpu.dot_dimension_numbers<[2], [1], [1], [2], [0, 0, 0, 1, 1, 2], [0], [0]>} : vector<2x32x24xbf16>, vector<2x24x256xbf16>, vector<2x32x256xf32> -> vector<2x32x256xf32>
    "tpu.trace_stop"() : () -> ()
    %c0_18 = arith.constant 0 : index
    %c0_19 = arith.constant 0 : index
    %20 = vector.load %arg8[%c0_18, %c0_19] : memref<32x1xf32, #tpu.memory_space<vmem>>, vector<32x1xf32>
    %c0_20 = arith.constant 0 : index
    %21 = memref.load %arg9[%c0_20] : memref<1xf32, #tpu.memory_space<smem>>
    %c0_21 = arith.constant 0 : index
    %c0_22 = arith.constant 0 : index
    %22 = vector.load %arg10[%c0_21, %c0_22] : memref<224x256xf32, #tpu.memory_space<vmem>>, vector<224x256xf32>
    %c0_23 = arith.constant 0 : index
    %c0_24 = arith.constant 0 : index
    %23 = vector.load %arg11[%c0_23, %c0_24] : memref<256x224xf32, #tpu.memory_space<vmem>>, vector<256x224xf32>
    %24 = vector.extract_strided_slice %19 {offsets = [0, 0, 0], sizes = [1, 32, 256], strides = [1, 1, 1]} : vector<2x32x256xf32> to vector<1x32x256xf32>
    %25 = vector.shape_cast %24 : vector<1x32x256xf32> to vector<32x256xf32>
    %26 = vector.extract_strided_slice %14 {offsets = [0, 0], sizes = [32, 1], strides = [1, 1]} : vector<32x2xf32> to vector<32x1xf32>
    %27 = vector.broadcast %26 : vector<32x1xf32> to vector<32x256xf32>
    %28 = arith.addf %25, %27 : vector<32x256xf32>
    %cst_25 = arith.constant 0.000000e+00 : f32
    %29 = vector.broadcast %cst_25 : f32 to vector<32x256xf32>
    %30 = arith.maximumf %28, %29 : vector<32x256xf32>
    %31 = vector.broadcast %20 : vector<32x1xf32> to vector<32x256xf32>
    %32 = arith.mulf %30, %31 : vector<32x256xf32>
    %cst_26 = arith.constant dense<0.000000e+00> : vector<256xf32>
    %33 = vector.multi_reduction <add>, %32, %cst_26 [0] : vector<32x256xf32> to vector<256xf32>
    %34 = vector.shape_cast %33 : vector<256xf32> to vector<1x256xf32>
    %35 = vector.broadcast %34 : vector<1x256xf32> to vector<224x256xf32>
    %36 = arith.mulf %22, %35 : vector<224x256xf32>
    %cst_27 = arith.constant dense<0.000000e+00> : vector<224x224xf32>
    %37 = tpu.matmul %36, %23, %cst_27 {dimension_numbers = #tpu.dot_dimension_numbers<[1], [0], [0], [1], [0, 0, 1, 1], [], []>} : vector<224x256xf32>, vector<256x224xf32>, vector<224x224xf32> -> vector<224x224xf32>
    %38 = vector.broadcast %21 : f32 to vector<224x224xf32>
    %39 = arith.addf %37, %38 : vector<224x224xf32>
    %c0_28 = arith.constant 0 : index
    %c0_29 = arith.constant 0 : index
    %c0_30 = arith.constant 0 : index
    %40 = vector.load %arg12[%c0_28, %c0_29, %c0_30] : memref<2x224x224xf32, #tpu.memory_space<vmem>>, vector<1x224x224xf32>
    %41 = vector.shape_cast %40 : vector<1x224x224xf32> to vector<224x224xf32>
    %42 = vector.shape_cast %39 : vector<224x224xf32> to vector<1x224x224xf32>
    tpu.vector_store %arg12[%c0_28, %c0_29, %c0_30], %42 {strides = array<i32>} : memref<2x224x224xf32, #tpu.memory_space<vmem>>, vector<1x224x224xf32>,
    %43 = vector.extract_strided_slice %19 {offsets = [1, 0, 0], sizes = [1, 32, 256], strides = [1, 1, 1]} : vector<2x32x256xf32> to vector<1x32x256xf32>
    %44 = vector.shape_cast %43 : vector<1x32x256xf32> to vector<32x256xf32>
    %45 = vector.extract_strided_slice %14 {offsets = [0, 1], sizes = [32, 1], strides = [1, 1]} : vector<32x2xf32> to vector<32x1xf32>
    %46 = vector.broadcast %45 : vector<32x1xf32> to vector<32x256xf32>
    %47 = arith.addf %44, %46 : vector<32x256xf32>
    %cst_31 = arith.constant 0.000000e+00 : f32
    %48 = vector.broadcast %cst_31 : f32 to vector<32x256xf32>
    %49 = arith.maximumf %47, %48 : vector<32x256xf32>
    %50 = vector.broadcast %20 : vector<32x1xf32> to vector<32x256xf32>
    %51 = arith.mulf %49, %50 : vector<32x256xf32>
    %cst_32 = arith.constant dense<0.000000e+00> : vector<256xf32>
    %52 = vector.multi_reduction <add>, %51, %cst_32 [0] : vector<32x256xf32> to vector<256xf32>
    %53 = vector.shape_cast %52 : vector<256xf32> to vector<1x256xf32>
    %54 = vector.broadcast %53 : vector<1x256xf32> to vector<224x256xf32>
    %55 = arith.mulf %22, %54 : vector<224x256xf32>
    %cst_33 = arith.constant dense<0.000000e+00> : vector<224x224xf32>
    %56 = tpu.matmul %55, %23, %cst_33 {dimension_numbers = #tpu.dot_dimension_numbers<[1], [0], [0], [1], [0, 0, 1, 1], [], []>} : vector<224x256xf32>, vector<256x224xf32>, vector<224x224xf32> -> vector<224x224xf32>
    %57 = vector.broadcast %21 : f32 to vector<224x224xf32>
    %58 = arith.addf %56, %57 : vector<224x224xf32>
    %c1 = arith.constant 1 : index
    %c0_34 = arith.constant 0 : index
    %c0_35 = arith.constant 0 : index
    %59 = vector.load %arg12[%c1, %c0_34, %c0_35] : memref<2x224x224xf32, #tpu.memory_space<vmem>>, vector<1x224x224xf32>
    %60 = vector.shape_cast %59 : vector<1x224x224xf32> to vector<224x224xf32>
    %61 = vector.shape_cast %58 : vector<224x224xf32> to vector<1x224x224xf32>
    tpu.vector_store %arg12[%c1, %c0_34, %c0_35], %61 {strides = array<i32>} : memref<2x224x224xf32, #tpu.memory_space<vmem>>, vector<1x224x224xf32>,
    return
  }
  func.func @transform_0(%arg0: i32) -> (i32, i32, i32) {
    %c0_i32 = arith.constant 0 : i32
    %c0_i32_0 = arith.constant 0 : i32
    %c0_i32_1 = arith.constant 0 : i32
    return %arg0, %c0_i32, %c0_i32_0 : i32, i32, i32
  }
  func.func @transform_1(%arg0: i32) -> (i32, i32, i32) {
    %c0_i32 = arith.constant 0 : i32
    %c0_i32_0 = arith.constant 0 : i32
    %c0_i32_1 = arith.constant 0 : i32
    return %arg0, %c0_i32, %c0_i32_0 : i32, i32, i32
  }
  func.func @transform_2(%arg0: i32) -> (i32, i32) {
    %c0_i32 = arith.constant 0 : i32
    %c0_i32_0 = arith.constant 0 : i32
    %c0_i32_1 = arith.constant 0 : i32
    return %c0_i32, %c0_i32_0 : i32, i32
  }
  func.func @transform_3(%arg0: i32) -> (i32, i32) {
    %c0_i32 = arith.constant 0 : i32
    %c0_i32_0 = arith.constant 0 : i32
    %c0_i32_1 = arith.constant 0 : i32
    return %c0_i32, %c0_i32_0 : i32, i32
  }
  func.func @transform_4(%arg0: i32) -> (i32, i32) {
    %c0_i32 = arith.constant 0 : i32
    %c0_i32_0 = arith.constant 0 : i32
    %c0_i32_1 = arith.constant 0 : i32
    return %c0_i32, %c0_i32_0 : i32, i32
  }
  func.func @transform_5(%arg0: i32) -> (i32, i32) {
    %c0_i32 = arith.constant 0 : i32
    %c0_i32_0 = arith.constant 0 : i32
    %c0_i32_1 = arith.constant 0 : i32
    return %c0_i32, %c0_i32_0 : i32, i32
  }
  func.func @transform_6(%arg0: i32) -> (i32, i32) {
    %c0_i32 = arith.constant 0 : i32
    %c0_i32_0 = arith.constant 0 : i32
    %c0_i32_1 = arith.constant 0 : i32
    return %c0_i32, %c0_i32_0 : i32, i32
  }
  func.func @transform_7(%arg0: i32) -> (i32, i32) {
    %c0_i32 = arith.constant 0 : i32
    %c0_i32_0 = arith.constant 0 : i32
    %c0_i32_1 = arith.constant 0 : i32
    return %c0_i32, %c0_i32_0 : i32, i32
  }
  func.func @transform_8(%arg0: i32) -> i32 {
    %c0_i32 = arith.constant 0 : i32
    %c0_i32_0 = arith.constant 0 : i32
    return %c0_i32 : i32
  }
  func.func @transform_9(%arg0: i32) -> (i32, i32) {
    %c0_i32 = arith.constant 0 : i32
    %c0_i32_0 = arith.constant 0 : i32
    %c0_i32_1 = arith.constant 0 : i32
    return %c0_i32, %c0_i32_0 : i32, i32
  }
  func.func @transform_10(%arg0: i32) -> (i32, i32) {
    %c0_i32 = arith.constant 0 : i32
    %c0_i32_0 = arith.constant 0 : i32
    %c0_i32_1 = arith.constant 0 : i32
    return %c0_i32, %c0_i32_0 : i32, i32
  }
  func.func @transform_11(%arg0: i32) -> (i32, i32, i32) {
    %c0_i32 = arith.constant 0 : i32
    %c0_i32_0 = arith.constant 0 : i32
    %c0_i32_1 = arith.constant 0 : i32
    return %arg0, %c0_i32, %c0_i32_0 : i32, i32, i32
  }
}

</mosaic_0001>

<llo_original>
// kernel: phrase_guided_segmentation.1
$region0: #{phrase_guided_segmentation.1}
  #allocation0 [shape = 'u32[]', space=smem, size = 0x4, offset = 0x4, fixed_abs, tag = 'smem constant byte address 0x4 - core index']
  #allocation1 [shape = 'u32[144,128]{1,0:T(1,128)}', space=vmem, size = 0x12000, scoped, tag = 'internal scratch']
  #allocation2 [shape = 'f32[1]{0:T(128)S(6)}', space=smem, size = 0x200, scoped, tag = 'scoped memory for phrase_guided_segmentation.1']
  %s0 = inlined_call_operand.hbm [shape: bf16[2,2,32], index: 0, kind: input, shape index: {}]
  %s1 = inlined_call_operand.hbm [shape: bf16[4,24,256], index: 1, kind: input, shape index: {}]
  %s2 = inlined_call_operand.hbm [shape: bf16[32,32], index: 2, kind: input, shape index: {}]
  %s3 = inlined_call_operand.hbm [shape: f32[32,1], index: 3, kind: input, shape index: {}]
  %s4 = inlined_call_operand.hbm [shape: bf16[32,32], index: 4, kind: input, shape index: {}]
  %s5 = inlined_call_operand.hbm [shape: f32[32,1], index: 5, kind: input, shape index: {}]
  %s6 = inlined_call_operand.hbm [shape: bf16[32,24], index: 6, kind: input, shape index: {}]
  %s7 = inlined_call_operand.hbm [shape: f32[32,1], index: 7, kind: input, shape index: {}]
  %s8 = inlined_call_operand.<no memory space> [shape: f32[1], index: 8, kind: input, shape index: {}]
  %s9 = inlined_call_operand.hbm [shape: f32[224,256], index: 9, kind: input, shape index: {}]
  %s10 = inlined_call_operand.hbm [shape: f32[256,224], index: 10, kind: input, shape index: {}]
  %s11 = inlined_call_operand.hbm [shape: f32[4,224,224], index: 11, kind: output, shape index: {}]
  %s12 = sld [smem:[#allocation0]]
  $region117: #{phrase_guided_segmentation.1} parent=0
    _
  %s14 = ssub.s32 1, %s12
  %s15 = scalar_select 0, %s14, %s12
  %16 = sst [smem:[#allocation2]] %s8
  $region1: #{phrase_guided_segmentation.1} parent=0
    #allocation3 [shape = 'u8[1024]{0}', space=vmem, size = 0x400, scoped, tag = 'input window, operand 0']
    #allocation4 [shape = 's32[2]{0}', space=sflag, size = 0x8, scoped, tag = 'scoped memory for phrase_guided_segmentation.1']
    #allocation5 [shape = 's32[2]{0}', space=sflag, size = 0x8, scoped, tag = 'scoped memory for phrase_guided_segmentation.1']
    #allocation6 [shape = 'u8[49152]{0}', space=vmem, size = 0xc000, scoped, tag = 'input window, operand 1']
    #allocation7 [shape = 's32[2]{0}', space=sflag, size = 0x8, scoped, tag = 'scoped memory for phrase_guided_segmentation.1']
    #allocation8 [shape = 'u8[8192]{0}', space=vmem, size = 0x2000, scoped, tag = 'input window, operand 2, single buffered']
    #allocation9 [shape = 'u8[16384]{0}', space=vmem, size = 0x4000, scoped, tag = 'input window, operand 3, single buffered']
    #allocation10 [shape = 's32[1]{0}', space=sflag, size = 0x4, scoped, tag = 'scoped memory for phrase_guided_segmentation.1']
    #allocation11 [shape = 'u8[8192]{0}', space=vmem, size = 0x2000, scoped, tag = 'input window, operand 4, single buffered']
    #allocation12 [shape = 'u8[16384]{0}', space=vmem, size = 0x4000, scoped, tag = 'input window, operand 5, single buffered']
    #allocation13 [shape = 's32[1]{0}', space=sflag, size = 0x4, scoped, tag = 'scoped memory for phrase_guided_segmentation.1']
    #allocation14 [shape = 'u8[8192]{0}', space=vmem, size = 0x2000, scoped, tag = 'input window, operand 6, single buffered']
    #allocation15 [shape = 'u8[16384]{0}', space=vmem, size = 0x4000, scoped, tag = 'input window, operand 7, single buffered']
    #allocation16 [shape = 's32[1]{0}', space=sflag, size = 0x4, scoped, tag = 'scoped memory for phrase_guided_segmentation.1']
    #allocation17 [shape = 'u8[229376]{0}', space=vmem, size = 0x38000, scoped, tag = 'input window, operand 9, single buffered']
    #allocation18 [shape = 'u8[262144]{0}', space=vmem, size = 0x40000, scoped, tag = 'input window, operand 10, single buffered']
    #allocation19 [shape = 's32[1]{0}', space=sflag, size = 0x4, scoped, tag = 'scoped memory for phrase_guided_segmentation.1']
    #allocation20 [shape = 'u8[917504]{0}', space=vmem, size = 0xe0000, scoped, tag = 'output window, operand 0']
    %17 = vsyncpa [#allocation4], 0
    %s18 = scalar_lea.sflag [#allocation4], 1
    %19 = vsyncpa %s18, 0
    %20 = vsyncpa [#allocation7], 0
    %s21 = scalar_lea.sflag [#allocation7], 1
    %22 = vsyncpa %s21, 0
    %23 = vsyncpa [#allocation10], 0
    %24 = vsyncpa [#allocation13], 0
    %25 = vsyncpa [#allocation16], 0
    %26 = vsyncpa [#allocation19], 0
    %27 = vsyncpa [#allocation5], 0
    %s28 = scalar_lea.sflag [#allocation5], 1
    %29 = vsyncpa %s28, 0
    loop: start=0, step=1, limit=4
    $region2: #{phrase_guided_segmentation.1} parent=1 // loop_pre_header
      _
    $region3: #{phrase_guided_segmentation.1} parent=1 // loop_header
      %s31 = sphi 0, %s35
      %p32 = scmp.ge.s32.totalorder %s31, 4
      %s41 = sphi 0, %s43
      %s44 = sphi 0, %s41
      %s45 = sphi 0, %s44
      %s61 = sphi 0, %s45
      %s67 = sphi 0, %s69
      %s70 = sphi 0, %s67
      %s71 = sphi 0, %s70
      %s87 = sphi 0, %s71
      %s91 = sphi 0, %s91
      %s93 = sphi 0, %s91
      %s94 = sphi 0, %s93
      %s108 = sphi 0, %s94
      %s112 = sphi 0, %s112
      %s114 = sphi 0, %s112
      %s115 = sphi 0, %s114
      %s129 = sphi 0, %s115
      %s133 = sphi 0, %s133
      %s135 = sphi 0, %s133
      %s136 = sphi 0, %s135
      %s150 = sphi 0, %s136
      %s154 = sphi 0, %s154
      %s156 = sphi 0, %s154
      %s157 = sphi 0, %s156
      %s171 = sphi 0, %s157
      %s175 = sphi 0, %s175
      %s177 = sphi 0, %s175
      %s178 = sphi 0, %s177
      %s192 = sphi 0, %s178
      %s196 = sphi 0, %s196
      %s198 = sphi 0, %s196
      %s199 = sphi 0, %s198
      %s213 = sphi 0, %s199
      %s217 = sphi 0, %s217
      %s219 = sphi 0, %s217
      %s220 = sphi 0, %s219
      %s234 = sphi 0, %s220
      %s238 = sphi 0, %s238
      %s240 = sphi 0, %s238
      %s241 = sphi 0, %s240
      %s255 = sphi 0, %s241
      %s259 = sphi 0, %s259
      %s261 = sphi 0, %s259
      %s262 = sphi 0, %s261
      %s276 = sphi 0, %s262
      %s282 = sphi 0, %s284
      %s285 = sphi 0, %s282
      %s286 = sphi 0, %s285
      %s302 = sphi 0, %s286
    $region4: #{phrase_guided_segmentation.1} parent=1 // loop_header_branch
      %34 = sbr.rel (%p32) target = $region8
    $region5: #{phrase_guided_segmentation.1} parent=1 // loop_body
      %s36 = ssub.s32 %s31, 1
      %s37 = ssub.s32 %s31, 2
      %s38 = sadd.s32 %s31, 1
      %s39 = ssub.s32 %s31, %s38
      %p40 = scmp.eq.s32.totalorder %s39, 0
      %s42 = sadd.s32 %s41, 1
      %s43 = scalar_select %p40, %s41, %s42
      %p46 = pneg %p40
      %p47 = scmp.eq.s32.totalorder %s31, 1
      %p48 = por %p46, %p47
      %p49 = scmp.ne.s32.totalorder %s41, %s44
      %p50 = scmp.eq.s32.totalorder %s31, 0
      %p51 = por %p49, %p50
      %p52 = scmp.ne.s32.totalorder %s41, %s44
      %p53 = scmp.eq.s32.totalorder %s36, 1
      %p54 = por %p52, %p53
      %p55 = scmp.ne.s32.totalorder %s44, %s45
      %p56 = scmp.eq.s32.totalorder %s36, 0
      %p57 = por %p55, %p56
      %p58 = scmp.ne.s32.totalorder %s44, %s45
      %p59 = scmp.eq.s32.totalorder %s37, 1
      %p60 = por %p58, %p59
      %p62 = scmp.ne.s32.totalorder %s45, %s61
      %p63 = scmp.eq.s32.totalorder %s37, 0
      %p64 = por %p62, %p63
      %s65 = ssub.s32 %s31, %s38
      %p66 = scmp.eq.s32.totalorder %s65, 0
      %s68 = sadd.s32 %s67, 1
      %s69 = scalar_select %p66, %s67, %s68
      %p72 = pneg %p66
      %p73 = scmp.eq.s32.totalorder %s31, 1
      %p74 = por %p72, %p73
      %p75 = scmp.ne.s32.totalorder %s67, %s70
      %p76 = scmp.eq.s32.totalorder %s31, 0
      %p77 = por %p75, %p76
      %p78 = scmp.ne.s32.totalorder %s67, %s70
      %p79 = scmp.eq.s32.totalorder %s36, 1
      %p80 = por %p78, %p79
      %p81 = scmp.ne.s32.totalorder %s70, %s71
      %p82 = scmp.eq.s32.totalorder %s36, 0
      %p83 = por %p81, %p82
      %p84 = scmp.ne.s32.totalorder %s70, %s71
      %p85 = scmp.eq.s32.totalorder %s37, 1
      %p86 = por %p84, %p85
      %p88 = scmp.ne.s32.totalorder %s71, %s87
      %p89 = scmp.eq.s32.totalorder %s37, 0
      %p90 = por %p88, %p89
      %s92 = sadd.s32 %s91, 1
      %p95 = scmp.eq.s32.totalorder %s31, 1
      %p96 = scmp.ne.s32.totalorder %s91, %s93
      %p97 = scmp.eq.s32.totalorder %s31, 0
      %p98 = por %p96, %p97
      %p99 = scmp.ne.s32.totalorder %s91, %s93
      %p100 = scmp.eq.s32.totalorder %s36, 1
      %p101 = por %p99, %p100
      %p102 = scmp.ne.s32.totalorder %s93, %s94
      %p103 = scmp.eq.s32.totalorder %s36, 0
      %p104 = por %p102, %p103
      %p105 = scmp.ne.s32.totalorder %s93, %s94
      %p106 = scmp.eq.s32.totalorder %s37, 1
      %p107 = por %p105, %p106
      %p109 = scmp.ne.s32.totalorder %s94, %s108
      %p110 = scmp.eq.s32.totalorder %s37, 0
      %p111 = por %p109, %p110
      %s113 = sadd.s32 %s112, 1
      %p116 = scmp.eq.s32.totalorder %s31, 1
      %p117 = scmp.ne.s32.totalorder %s112, %s114
      %p118 = scmp.eq.s32.totalorder %s31, 0
      %p119 = por %p117, %p118
      %p120 = scmp.ne.s32.totalorder %s112, %s114
      %p121 = scmp.eq.s32.totalorder %s36, 1
      %p122 = por %p120, %p121
      %p123 = scmp.ne.s32.totalorder %s114, %s115
      %p124 = scmp.eq.s32.totalorder %s36, 0
      %p125 = por %p123, %p124
      %p126 = scmp.ne.s32.totalorder %s114, %s115
      %p127 = scmp.eq.s32.totalorder %s37, 1
      %p128 = por %p126, %p127
      %p130 = scmp.ne.s32.totalorder %s115, %s129
      %p131 = scmp.eq.s32.totalorder %s37, 0
      %p132 = por %p130, %p131
      %s134 = sadd.s32 %s133, 1
      %p137 = scmp.eq.s32.totalorder %s31, 1
      %p138 = scmp.ne.s32.totalorder %s133, %s135
      %p139 = scmp.eq.s32.totalorder %s31, 0
      %p140 = por %p138, %p139
      %p141 = scmp.ne.s32.totalorder %s133, %s135
      %p142 = scmp.eq.s32.totalorder %s36, 1
      %p143 = por %p141, %p142
      %p144 = scmp.ne.s32.totalorder %s135, %s136
      %p145 = scmp.eq.s32.totalorder %s36, 0
      %p146 = por %p144, %p145
      %p147 = scmp.ne.s32.totalorder %s135, %s136
      %p148 = scmp.eq.s32.totalorder %s37, 1
      %p149 = por %p147, %p148
      %p151 = scmp.ne.s32.totalorder %s136, %s150
      %p152 = scmp.eq.s32.totalorder %s37, 0
      %p153 = por %p151, %p152
      %s155 = sadd.s32 %s154, 1
      %p158 = scmp.eq.s32.totalorder %s31, 1
      %p159 = scmp.ne.s32.totalorder %s154, %s156
      %p160 = scmp.eq.s32.totalorder %s31, 0
      %p161 = por %p159, %p160
      %p162 = scmp.ne.s32.totalorder %s154, %s156
      %p163 = scmp.eq.s32.totalorder %s36, 1
      %p164 = por %p162, %p163
      %p165 = scmp.ne.s32.totalorder %s156, %s157
      %p166 = scmp.eq.s32.totalorder %s36, 0
      %p167 = por %p165, %p166
      %p168 = scmp.ne.s32.totalorder %s156, %s157
      %p169 = scmp.eq.s32.totalorder %s37, 1
      %p170 = por %p168, %p169
      %p172 = scmp.ne.s32.totalorder %s157, %s171
      %p173 = scmp.eq.s32.totalorder %s37, 0
      %p174 = por %p172, %p173
      %s176 = sadd.s32 %s175, 1
      %p179 = scmp.eq.s32.totalorder %s31, 1
      %p180 = scmp.ne.s32.totalorder %s175, %s177
      %p181 = scmp.eq.s32.totalorder %s31, 0
      %p182 = por %p180, %p181
      %p183 = scmp.ne.s32.totalorder %s175, %s177
      %p184 = scmp.eq.s32.totalorder %s36, 1
      %p185 = por %p183, %p184
      %p186 = scmp.ne.s32.totalorder %s177, %s178
      %p187 = scmp.eq.s32.totalorder %s36, 0
      %p188 = por %p186, %p187
      %p189 = scmp.ne.s32.totalorder %s177, %s178
      %p190 = scmp.eq.s32.totalorder %s37, 1
      %p191 = por %p189, %p190
      %p193 = scmp.ne.s32.totalorder %s178, %s192
      %p194 = scmp.eq.s32.totalorder %s37, 0
      %p195 = por %p193, %p194
      %s197 = sadd.s32 %s196, 1
      %p200 = scmp.eq.s32.totalorder %s31, 1
      %p201 = scmp.ne.s32.totalorder %s196, %s198
      %p202 = scmp.eq.s32.totalorder %s31, 0
      %p203 = por %p201, %p202
      %p204 = scmp.ne.s32.totalorder %s196, %s198
      %p205 = scmp.eq.s32.totalorder %s36, 1
      %p206 = por %p204, %p205
      %p207 = scmp.ne.s32.totalorder %s198, %s199
      %p208 = scmp.eq.s32.totalorder %s36, 0
      %p209 = por %p207, %p208
      %p210 = scmp.ne.s32.totalorder %s198, %s199
      %p211 = scmp.eq.s32.totalorder %s37, 1
      %p212 = por %p210, %p211
      %p214 = scmp.ne.s32.totalorder %s199, %s213
      %p215 = scmp.eq.s32.totalorder %s37, 0
      %p216 = por %p214, %p215
      %s218 = sadd.s32 %s217, 1
      %p221 = scmp.eq.s32.totalorder %s31, 1
      %p222 = scmp.ne.s32.totalorder %s217, %s219
      %p223 = scmp.eq.s32.totalorder %s31, 0
      %p224 = por %p222, %p223
      %p225 = scmp.ne.s32.totalorder %s217, %s219
      %p226 = scmp.eq.s32.totalorder %s36, 1
      %p227 = por %p225, %p226
      %p228 = scmp.ne.s32.totalorder %s219, %s220
      %p229 = scmp.eq.s32.totalorder %s36, 0
      %p230 = por %p228, %p229
      %p231 = scmp.ne.s32.totalorder %s219, %s220
      %p232 = scmp.eq.s32.totalorder %s37, 1
      %p233 = por %p231, %p232
      %p235 = scmp.ne.s32.totalorder %s220, %s234
      %p236 = scmp.eq.s32.totalorder %s37, 0
      %p237 = por %p235, %p236
      %s239 = sadd.s32 %s238, 1
      %p242 = scmp.eq.s32.totalorder %s31, 1
      %p243 = scmp.ne.s32.totalorder %s238, %s240
      %p244 = scmp.eq.s32.totalorder %s31, 0
      %p245 = por %p243, %p244
      %p246 = scmp.ne.s32.totalorder %s238, %s240
      %p247 = scmp.eq.s32.totalorder %s36, 1
      %p248 = por %p246, %p247
      %p249 = scmp.ne.s32.totalorder %s240, %s241
      %p250 = scmp.eq.s32.totalorder %s36, 0
      %p251 = por %p249, %p250
      %p252 = scmp.ne.s32.totalorder %s240, %s241
      %p253 = scmp.eq.s32.totalorder %s37, 1
      %p254 = por %p252, %p253
      %p256 = scmp.ne.s32.totalorder %s241, %s255
      %p257 = scmp.eq.s32.totalorder %s37, 0
      %p258 = por %p256, %p257
      %s260 = sadd.s32 %s259, 1
      %p263 = scmp.eq.s32.totalorder %s31, 1
      %p264 = scmp.ne.s32.totalorder %s259, %s261
      %p265 = scmp.eq.s32.totalorder %s31, 0
      %p266 = por %p264, %p265
      %p267 = scmp.ne.s32.totalorder %s259, %s261
      %p268 = scmp.eq.s32.totalorder %s36, 1
      %p269 = por %p267, %p268
      %p270 = scmp.ne.s32.totalorder %s261, %s262
      %p271 = scmp.eq.s32.totalorder %s36, 0
      %p272 = por %p270, %p271
      %p273 = scmp.ne.s32.totalorder %s261, %s262
      %p274 = scmp.eq.s32.totalorder %s37, 1
      %p275 = por %p273, %p274
      %p277 = scmp.ne.s32.totalorder %s262, %s276
      %p278 = scmp.eq.s32.totalorder %s37, 0
      %p279 = por %p277, %p278
      %s280 = ssub.s32 %s31, %s38
      %p281 = scmp.eq.s32.totalorder %s280, 0
      %s283 = sadd.s32 %s282, 1
      %s284 = scalar_select %p281, %s282, %s283
      %p287 = pneg %p281
      %p288 = scmp.eq.s32.totalorder %s31, 1
      %p289 = por %p287, %p288
      %p290 = scmp.ne.s32.totalorder %s282, %s285
      %p291 = scmp.eq.s32.totalorder %s31, 0
      %p292 = por %p290, %p291
      %p293 = scmp.ne.s32.totalorder %s282, %s285
      %p294 = scmp.eq.s32.totalorder %s36, 1
      %p295 = por %p293, %p294
      %p296 = scmp.ne.s32.totalorder %s285, %s286
      %p297 = scmp.eq.s32.totalorder %s36, 0
      %p298 = por %p296, %p297
      %p299 = scmp.ne.s32.totalorder %s285, %s286
      %p300 = scmp.eq.s32.totalorder %s37, 1
      %p301 = por %p299, %p300
      %p303 = scmp.ne.s32.totalorder %s286, %s302
      %p304 = scmp.eq.s32.totalorder %s37, 0
      %p305 = por %p303, %p304
      %p306 = scmp.le.s32.totalorder 1, %s31
      %p307 = scmp.lt.s32.totalorder %s31, 3
      %p308 = pnand %p306, %p307
      %p309 = pneg %p308
      // Predicated region
      $region9: #{phrase_guided_segmentation.1} parent=5 // pred_check
        _
      $region10: #{phrase_guided_segmentation.1} parent=5 // pred_check_branch
        %311 = sbr.rel (%p308) target = $region12
      $region11: #{phrase_guided_segmentation.1} parent=5 // pred_region
        %s312 = ssub.s32 %s31, 1
        // Predicated region
        $region13: #{phrase_guided_segmentation.1} parent=11 // pred_check
          %p313 = pneg %p104
        $region14: #{phrase_guided_segmentation.1} parent=11 // pred_check_branch
          %315 = sbr.rel (%p313) target = $region16
        $region15: #{phrase_guided_segmentation.1} parent=11 // pred_region
          %s317 = ssub.s32 256, 256
          %318 = vsyncadd [#allocation7], %s317
          %s319 = sshll.u32 [#allocation8], 4
          %s320 = int_to_ptr.vmem [resolvable:$true] %s319
          %325 = dma.hbm_to_vmem [thread:$0]  %s2, 256, %s320, [#allocation7], 64, 64, 4
        $region16: #{phrase_guided_segmentation.1} parent=11 // pred_fallthru
          _
        // Predicated region
        $region17: #{phrase_guided_segmentation.1} parent=11 // pred_check
          %p326 = pneg %p125
        $region18: #{phrase_guided_segmentation.1} parent=11 // pred_check_branch
          %328 = sbr.rel (%p326) target = $region20
        $region19: #{phrase_guided_segmentation.1} parent=11 // pred_region
          %s330 = ssub.s32 512, 512
          %331 = vsyncadd [#allocation10], %s330
          %s332 = sshll.u32 [#allocation9], 4
          %s333 = int_to_ptr.vmem [resolvable:$true] %s332
          %338 = dma.hbm_to_vmem [thread:$0]  %s3, 512, %s333, [#allocation10], 128, 128, 8
        $region20: #{phrase_guided_segmentation.1} parent=11 // pred_fallthru
          _
        // Predicated region
        $region21: #{phrase_guided_segmentation.1} parent=11 // pred_check
          %p339 = pneg %p146
        $region22: #{phrase_guided_segmentation.1} parent=11 // pred_check_branch
          %341 = sbr.rel (%p339) target = $region24
        $region23: #{phrase_guided_segmentation.1} parent=11 // pred_region
          %s343 = ssub.s32 256, 256
          %344 = vsyncadd [#allocation10], %s343
          %s345 = sshll.u32 [#allocation11], 4
          %s346 = int_to_ptr.vmem [resolvable:$true] %s345
          %351 = dma.hbm_to_vmem [thread:$0]  %s4, 256, %s346, [#allocation10], 64, 64, 4
        $region24: #{phrase_guided_segmentation.1} parent=11 // pred_fallthru
          _
        // Predicated region
        $region25: #{phrase_guided_segmentation.1} parent=11 // pred_check
          %p352 = pneg %p167
        $region26: #{phrase_guided_segmentation.1} parent=11 // pred_check_branch
          %354 = sbr.rel (%p352) target = $region28
        $region27: #{phrase_guided_segmentation.1} parent=11 // pred_region
          %s356 = ssub.s32 512, 512
          %357 = vsyncadd [#allocation13], %s356
          %s358 = sshll.u32 [#allocation12], 4
          %s359 = int_to_ptr.vmem [resolvable:$true] %s358
          %364 = dma.hbm_to_vmem [thread:$0]  %s5, 512, %s359, [#allocation13], 128, 128, 8
        $region28: #{phrase_guided_segmentation.1} parent=11 // pred_fallthru
          _
        // Predicated region
        $region29: #{phrase_guided_segmentation.1} parent=11 // pred_check
          %p365 = pneg %p188
        $region30: #{phrase_guided_segmentation.1} parent=11 // pred_check_branch
          %367 = sbr.rel (%p365) target = $region32
        $region31: #{phrase_guided_segmentation.1} parent=11 // pred_region
          %s369 = ssub.s32 256, 256
          %370 = vsyncadd [#allocation13], %s369
          %s371 = sshll.u32 [#allocation14], 4
          %s372 = int_to_ptr.vmem [resolvable:$true] %s371
          %377 = dma.hbm_to_vmem [thread:$0]  %s6, 256, %s372, [#allocation13], 64, 64, 4
        $region32: #{phrase_guided_segmentation.1} parent=11 // pred_fallthru
          _
        // Predicated region
        $region33: #{phrase_guided_segmentation.1} parent=11 // pred_check
          %p378 = pneg %p209
        $region34: #{phrase_guided_segmentation.1} parent=11 // pred_check_branch
          %380 = sbr.rel (%p378) target = $region36
        $region35: #{phrase_guided_segmentation.1} parent=11 // pred_region
          %s382 = ssub.s32 512, 512
          %383 = vsyncadd [#allocation16], %s382
          %s384 = sshll.u32 [#allocation15], 4
          %s385 = int_to_ptr.vmem [resolvable:$true] %s384
          %390 = dma.hbm_to_vmem [thread:$0]  %s7, 512, %s385, [#allocation16], 128, 128, 8
        $region36: #{phrase_guided_segmentation.1} parent=11 // pred_fallthru
          _
        // Predicated region
        $region37: #{phrase_guided_segmentation.1} parent=11 // pred_check
          %p391 = pneg %p230
        $region38: #{phrase_guided_segmentation.1} parent=11 // pred_check_branch
          %393 = sbr.rel (%p391) target = $region40
        $region39: #{phrase_guided_segmentation.1} parent=11 // pred_region
          _
        $region40: #{phrase_guided_segmentation.1} parent=11 // pred_fallthru
          _
        // Predicated region
        $region41: #{phrase_guided_segmentation.1} parent=11 // pred_check
          %p394 = pneg %p251
        $region42: #{phrase_guided_segmentation.1} parent=11 // pred_check_branch
          %396 = sbr.rel (%p394) target = $region44
        $region43: #{phrase_guided_segmentation.1} parent=11 // pred_region
          %s398 = ssub.s32 7168, 7168
          %399 = vsyncadd [#allocation16], %s398
          %s400 = sshll.u32 [#allocation17], 4
          %s401 = int_to_ptr.vmem [resolvable:$true] %s400
          %406 = dma.hbm_to_vmem [thread:$0]  %s9, 7168, %s401, [#allocation16], 256, 256, 16
        $region44: #{phrase_guided_segmentation.1} parent=11 // pred_fallthru
          _
        // Predicated region
        $region45: #{phrase_guided_segmentation.1} parent=11 // pred_check
          %p407 = pneg %p272
        $region46: #{phrase_guided_segmentation.1} parent=11 // pred_check_branch
          %409 = sbr.rel (%p407) target = $region48
        $region47: #{phrase_guided_segmentation.1} parent=11 // pred_region
          %s411 = ssub.s32 8192, 8192
          %412 = vsyncadd [#allocation19], %s411
          %s413 = sshll.u32 [#allocation18], 4
          %s414 = int_to_ptr.vmem [resolvable:$true] %s413
          %419 = dma.hbm_to_vmem [thread:$0]  %s10, 8192, %s414, [#allocation19], 256, 256, 16
        $region48: #{phrase_guided_segmentation.1} parent=11 // pred_fallthru
          _
      $region12: #{phrase_guided_segmentation.1} parent=5 // pred_fallthru
        _
      %p420 = scmp.lt.s32.totalorder %s31, 2
      // Predicated region
      $region49: #{phrase_guided_segmentation.1} parent=5 // pred_check
        %p421 = pneg %p420
      $region50: #{phrase_guided_segmentation.1} parent=5 // pred_check_branch
        %423 = sbr.rel (%p421) target = $region52
      $region51: #{phrase_guided_segmentation.1} parent=5 // pred_region
        // Predicated region
        $region53: #{phrase_guided_segmentation.1} parent=51 // pred_check
          %p424 = pneg %p51
        $region54: #{phrase_guided_segmentation.1} parent=51 // pred_check_branch
          %426 = sbr.rel (%p424) target = $region56
        $region55: #{phrase_guided_segmentation.1} parent=51 // pred_region
          %s427 = sand.u32 %s41, 1
          %s428 = scalar_lea.sflag [#allocation4], %s427
          %s429 = sand.u32 %s41, 1
          %s430 = scalar_lea.vmem [#allocation3], %s429
          %s432 = ssub.s32 16, 16
          %433 = vsyncadd %s428, %s432
          %s434 = smul.addr %s31, 16
          %s435 = scalar_lea.hbm %s0, %s434
          %s437 = sshll.u32 %s430, 4
          %s438 = int_to_ptr.vmem [resolvable:$true] %s437
          %440 = dma.hbm_to_vmem [thread:$0]  %s435, 16, %s438, %s428
        $region56: #{phrase_guided_segmentation.1} parent=51 // pred_fallthru
          _
        // Predicated region
        $region57: #{phrase_guided_segmentation.1} parent=51 // pred_check
          %p441 = pneg %p77
        $region58: #{phrase_guided_segmentation.1} parent=51 // pred_check_branch
          %443 = sbr.rel (%p441) target = $region60
        $region59: #{phrase_guided_segmentation.1} parent=51 // pred_region
          %s444 = sand.u32 %s31, 1
          %s445 = scalar_lea.sflag [#allocation7], %s444
          %s446 = sand.u32 %s67, 1
          %s447 = smul.addr %s446, 48
          %s448 = scalar_lea.vmem [#allocation6], %s447
          %s449 = smul.u32 2, %s31
          %s451 = ssub.s32 768, 768
          %452 = vsyncadd %s445, %s451
          %s453 = smul.addr %s449, 6
          %s454 = smul.addr %s453, 64
          %s455 = scalar_lea.hbm %s1, %s454
          %s456 = sshll.u32 %s448, 4
          %s457 = int_to_ptr.vmem [resolvable:$true] %s456
          %462 = dma.hbm_to_vmem [thread:$0]  %s455, 768, %s457, %s445, 128, 128, 8
        $region60: #{phrase_guided_segmentation.1} parent=51 // pred_fallthru
          _
      $region52: #{phrase_guided_segmentation.1} parent=5 // pred_fallthru
        _
      %p463 = scmp.le.s32.totalorder 1, %s31
      %p464 = scmp.lt.s32.totalorder %s31, 3
      %p465 = pnand %p463, %p464
      %p466 = pneg %p465
      // Predicated region
      $region61: #{phrase_guided_segmentation.1} parent=5 // pred_check
        _
      $region62: #{phrase_guided_segmentation.1} parent=5 // pred_check_branch
        %468 = sbr.rel (%p465) target = $region64
      $region63: #{phrase_guided_segmentation.1} parent=5 // pred_region
        %s469 = ssub.s32 %s31, 1
        %s470 = sand.u32 %s44, 1
        %s471 = scalar_lea.sflag [#allocation4], %s470
        %s472 = sand.u32 %s44, 1
        %s473 = scalar_lea.vmem [#allocation3], %s472
        // Predicated region
        $region65: #{phrase_guided_segmentation.1} parent=63 // pred_check
          %p474 = pneg %p57
        $region66: #{phrase_guided_segmentation.1} parent=63 // pred_check_branch
          %476 = sbr.rel (%p474) target = $region68
        $region67: #{phrase_guided_segmentation.1} parent=63 // pred_region
          %477 = dma.done %s471, 16
        $region68: #{phrase_guided_segmentation.1} parent=63 // pred_fallthru
          _
        %s478 = sand.u32 %s36, 1
        %s479 = scalar_lea.sflag [#allocation7], %s478
        %s480 = sand.u32 %s70, 1
        %s481 = smul.addr %s480, 48
        %s482 = scalar_lea.vmem [#allocation6], %s481
        // Predicated region
        $region69: #{phrase_guided_segmentation.1} parent=63 // pred_check
          %p483 = pneg %p83
        $region70: #{phrase_guided_segmentation.1} parent=63 // pred_check_branch
          %485 = sbr.rel (%p483) target = $region72
        $region71: #{phrase_guided_segmentation.1} parent=63 // pred_region
          %486 = dma.done %s479, 768
        $region72: #{phrase_guided_segmentation.1} parent=63 // pred_fallthru
          _
        // Predicated region
        $region73: #{phrase_guided_segmentation.1} parent=63 // pred_check
          %p487 = pneg %p104
        $region74: #{phrase_guided_segmentation.1} parent=63 // pred_check_branch
          %489 = sbr.rel (%p487) target = $region76
        $region75: #{phrase_guided_segmentation.1} parent=63 // pred_region
          %490 = dma.done [#allocation7], 256
        $region76: #{phrase_guided_segmentation.1} parent=63 // pred_fallthru
          _
        // Predicated region
        $region77: #{phrase_guided_segmentation.1} parent=63 // pred_check
          %p491 = pneg %p125
        $region78: #{phrase_guided_segmentation.1} parent=63 // pred_check_branch
          %493 = sbr.rel (%p491) target = $region80
        $region79: #{phrase_guided_segmentation.1} parent=63 // pred_region
          %494 = dma.done [#allocation10], 512
        $region80: #{phrase_guided_segmentation.1} parent=63 // pred_fallthru
          _
        // Predicated region
        $region81: #{phrase_guided_segmentation.1} parent=63 // pred_check
          %p495 = pneg %p146
        $region82: #{phrase_guided_segmentation.1} parent=63 // pred_check_branch
          %497 = sbr.rel (%p495) target = $region84
        $region83: #{phrase_guided_segmentation.1} parent=63 // pred_region
          %498 = dma.done [#allocation10], 256
        $region84: #{phrase_guided_segmentation.1} parent=63 // pred_fallthru
          _
        // Predicated region
        $region85: #{phrase_guided_segmentation.1} parent=63 // pred_check
          %p499 = pneg %p167
        $region86: #{phrase_guided_segmentation.1} parent=63 // pred_check_branch
          %501 = sbr.rel (%p499) target = $region88
        $region87: #{phrase_guided_segmentation.1} parent=63 // pred_region
          %502 = dma.done [#allocation13], 512
        $region88: #{phrase_guided_segmentation.1} parent=63 // pred_fallthru
          _
        // Predicated region
        $region89: #{phrase_guided_segmentation.1} parent=63 // pred_check
          %p503 = pneg %p188
        $region90: #{phrase_guided_segmentation.1} parent=63 // pred_check_branch
          %505 = sbr.rel (%p503) target = $region92
        $region91: #{phrase_guided_segmentation.1} parent=63 // pred_region
          %506 = dma.done [#allocation13], 256
        $region92: #{phrase_guided_segmentation.1} parent=63 // pred_fallthru
          _
        // Predicated region
        $region93: #{phrase_guided_segmentation.1} parent=63 // pred_check
          %p507 = pneg %p209
        $region94: #{phrase_guided_segmentation.1} parent=63 // pred_check_branch
          %509 = sbr.rel (%p507) target = $region96
        $region95: #{phrase_guided_segmentation.1} parent=63 // pred_region
          %510 = dma.done [#allocation16], 512
        $region96: #{phrase_guided_segmentation.1} parent=63 // pred_fallthru
          _
        // Predicated region
        $region97: #{phrase_guided_segmentation.1} parent=63 // pred_check
          %p511 = pneg %p251
        $region98: #{phrase_guided_segmentation.1} parent=63 // pred_check_branch
          %513 = sbr.rel (%p511) target = $region100
        $region99: #{phrase_guided_segmentation.1} parent=63 // pred_region
          %514 = dma.done [#allocation16], 7168
        $region100: #{phrase_guided_segmentation.1} parent=63 // pred_fallthru
          _
        // Predicated region
        $region101: #{phrase_guided_segmentation.1} parent=63 // pred_check
          %p515 = pneg %p272
        $region102: #{phrase_guided_segmentation.1} parent=63 // pred_check_branch
          %517 = sbr.rel (%p515) target = $region104
        $region103: #{phrase_guided_segmentation.1} parent=63 // pred_region
          %518 = dma.done [#allocation19], 8192
        $region104: #{phrase_guided_segmentation.1} parent=63 // pred_fallthru
          _
        %s519 = sand.u32 %s44, 1
        %s520 = scalar_lea.sflag [#allocation4], %s519
        %s521 = sand.u32 %s44, 1
        %s522 = scalar_lea.vmem [#allocation3], %s521
        %p523 = pneg %p57
        %p524 = pneg %p54
        %s525 = sand.u32 %s36, 1
        %s526 = scalar_lea.sflag [#allocation7], %s525
        %s527 = sand.u32 %s70, 1
        %s528 = smul.addr %s527, 48
        %s529 = scalar_lea.vmem [#allocation6], %s528
        %p530 = pneg %p83
        %p531 = pneg %p80
        %p532 = pneg %p104
        %p533 = pneg %p101
        %p534 = pneg %p125
        %p535 = pneg %p122
        %p536 = pneg %p146
        %p537 = pneg %p143
        %p538 = pneg %p167
        %p539 = pneg %p164
        %p540 = pneg %p188
        %p541 = pneg %p185
        %p542 = pneg %p209
        %p543 = pneg %p206
        %p544 = pneg %p230
        %p545 = pneg %p227
        %p546 = pneg %p251
        %p547 = pneg %p248
        %p548 = pneg %p272
        %p549 = pneg %p269
        %p550 = pneg %p298
        %p551 = pneg %p295
        %s552 = sand.u32 %s285, 1
        %s553 = scalar_lea.sflag [#allocation5], %s552
        %s554 = sand.u32 %s285, 1
        %s555 = smul.addr %s554, 896
        %s556 = scalar_lea.vmem [#allocation20], %s555
        %s557 = smul.u32 2, %s36
        %s558 = smul.u32 2, %s36
        %v560 = vld [vmem:[%s473] sm:$0x1]
        %v561 = vld [vmem:[#allocation8] sm:$0xf]
        %v562 = vld [vmem:[#allocation8 + $0x4] sm:$0xf]
        %v563 = vld [vmem:[#allocation8 + $0x8] sm:$0xf]
        %v564 = vld [vmem:[#allocation8 + $0xc] sm:$0xf]
        %v565 = vld [vmem:[#allocation9] sm:$0xff]
        %v566 = vld [vmem:[#allocation9 + $0x8] sm:$0xff]
        %v567 = vld [vmem:[#allocation9 + $0x10] sm:$0xff]
        %v568 = vld [vmem:[#allocation9 + $0x18] sm:$0xff]
        %570 = vset.pattern.permute.xlu0 0
        %571 = vperm.xlu0 %570, %v565
        %v572 = vpop.permute.xlu0 %571
        %575 = vset.pattern.permute.xlu0 0
        %576 = vperm.xlu0 %575, %v566
        %v577 = vpop.permute.xlu0 %576
        %580 = vset.pattern.permute.xlu0 0
        %581 = vperm.xlu0 %580, %v567
        %v582 = vpop.permute.xlu0 %581
        %585 = vset.pattern.permute.xlu0 0
        %586 = vperm.xlu0 %585, %v568
        %v587 = vpop.permute.xlu0 %586
        %v593 = vunpack.c.l.b16 %v561
        %v594 = vunpack.c.l.b16 %v562
        %v595 = vunpack.c.l.b16 %v563
        %v596 = vunpack.c.l.b16 %v564
        %v597 = vpack.c.b16 %v594, %v593
        %v598 = vpack.c.b16 %v596, %v595
        %vm599 = vcmask 261120
        %v601 = vsel %vm599, %v597, 0
        %v604 = vsel %vm599, %v598, 0
        %v607 = vsel %vm599, %v560, 0
        %609 = vmatprep.subr.bf16.mxu0 0
        %610 = vmatpush1.bf16.xpose.msra.mxu0 %v607
        %611 = vmatprep.subr.bf16.mxu0 0
        %612 = vmatpush1.bf16.xpose.msra.mxu0 0
        %613 = vmatprep.subr.bf16.mxu0 0
        %614 = vmatpush1.bf16.xpose.msra.mxu0 0
        %615 = vmatprep.subr.bf16.mxu0 0
        %616 = vmatpush1.bf16.xpose.msra.mxu0 0
        %617 = vmatprep.subr.bf16.mxu0 0
        %618 = vmatpush1.bf16.xpose.msra.mxu0 0
        %619 = vmatprep.subr.bf16.mxu0 0
        %620 = vmatpush1.bf16.xpose.msra.mxu0 0
        %621 = vmatprep.subr.bf16.mxu0 0
        %622 = vmatpush1.bf16.xpose.msra.mxu0 0
        %623 = vmatprep.subr.bf16.mxu0 0
        %624 = vmatpush1.bf16.xpose.msra.mxu0 0
        %625 = vmatprep.subr.bf16.mxu0 0
        %626 = vmatpush1.bf16.xpose.msra.mxu0 0
        %627 = vmatprep.subr.bf16.mxu0 0
        %628 = vmatpush1.bf16.xpose.msra.mxu0 0
        %629 = vmatprep.subr.bf16.mxu0 0
        %630 = vmatpush1.bf16.xpose.msra.mxu0 0
        %631 = vmatprep.subr.bf16.mxu0 0
        %632 = vmatpush1.bf16.xpose.msra.mxu0 0
        %633 = vmatprep.subr.bf16.mxu0 0
        %634 = vmatpush1.bf16.xpose.msra.mxu0 0
        %635 = vmatprep.subr.bf16.mxu0 0
        %636 = vmatpush1.bf16.xpose.msra.mxu0 0
        %637 = vmatprep.subr.bf16.mxu0 0
        %638 = vmatpush1.bf16.xpose.msra.mxu0 0
        %639 = vmatprep.subr.bf16.mxu0 0
        %640 = vmatpush1.bf16.xpose.msra.mxu0 0
        %641 = vmatprep.mubr.bf16.mxu0 0
        %642 = vmatmul.mubr.bf16.gmra.mrb[0].mxu0 %v601
        %v643 = vpop.f32.mrb[0].mxu0
        %v644 = vadd.f32 %v572, %v643
        %v645 = vpop.f32.mrb[0].mxu0
        %v646 = vpop.f32.mrb[0].mxu0
        %v647 = vadd.f32 %v577, %v646
        %v648 = vpop.f32.mrb[0].mxu0
        %649 = vmatprep.mubr.bf16.mxu0 0
        %650 = vmatmul.mubr.bf16.gmra.mrb[0].mxu0 %v604
        %v651 = vpop.f32.mrb[0].mxu0
        %v652 = vadd.f32 %v582, %v651
        %v653 = vpop.f32.mrb[0].mxu0
        %v654 = vpop.f32.mrb[0].mxu0
        %v655 = vadd.f32 %v587, %v654
        %v656 = vpop.f32.mrb[0].mxu0
        %657 = vdwg.mxu0
        %v658 = vmax.f32 %v644, 0.0
        %v659 = vmax.f32 %v647, 0.0
        %v660 = vmax.f32 %v652, 0.0
        %v661 = vmax.f32 %v655, 0.0
        %v662 = vld [vmem:[#allocation11] sm:$0xf]
        %v663 = vld [vmem:[#allocation11 + $0x4] sm:$0xf]
        %v664 = vld [vmem:[#allocation11 + $0x8] sm:$0xf]
        %v665 = vld [vmem:[#allocation11 + $0xc] sm:$0xf]
        %v666 = vpack.c.bf16 %v659, %v658
        %v667 = vpack.c.bf16 %v661, %v660
        %v668 = vld [vmem:[#allocation12] sm:$0xff]
        %v669 = vld [vmem:[#allocation12 + $0x8] sm:$0xff]
        %v670 = vld [vmem:[#allocation12 + $0x10] sm:$0xff]
        %v671 = vld [vmem:[#allocation12 + $0x18] sm:$0xff]
        %673 = vset.pattern.permute.xlu0 0
        %674 = vperm.xlu0 %673, %v668
        %v675 = vpop.permute.xlu0 %674
        %678 = vset.pattern.permute.xlu0 0
        %679 = vperm.xlu0 %678, %v669
        %v680 = vpop.permute.xlu0 %679
        %683 = vset.pattern.permute.xlu0 0
        %684 = vperm.xlu0 %683, %v670
        %v685 = vpop.permute.xlu0 %684
        %688 = vset.pattern.permute.xlu0 0
        %689 = vperm.xlu0 %688, %v671
        %v690 = vpop.permute.xlu0 %689
        %v696 = vunpack.c.l.b16 %v662
        %v697 = vunpack.c.l.b16 %v663
        %v698 = vunpack.c.l.b16 %v664
        %v699 = vunpack.c.l.b16 %v665
        %v700 = vpack.c.b16 %v697, %v696
        %v701 = vpack.c.b16 %v699, %v698
        %v703 = vsel %vm599, %v700, 0
        %v706 = vsel %vm599, %v701, 0
        %708 = vmatprep.subr.bf16.mxu0 0
        %709 = vmatpush1.bf16.msra.mxu0 %v666
        %710 = vmatprep.subr.bf16.mxu0 0
        %711 = vmatpush1.bf16.msra.mxu0 %v667
        %712 = vmatprep.subr.bf16.mxu0 0
        %713 = vmatpush1.bf16.msra.mxu0 0
        %714 = vmatprep.subr.bf16.mxu0 0
        %715 = vmatpush1.bf16.msra.mxu0 0
        %716 = vmatprep.subr.bf16.mxu0 0
        %717 = vmatpush1.bf16.msra.mxu0 0
        %718 = vmatprep.subr.bf16.mxu0 0
        %719 = vmatpush1.bf16.msra.mxu0 0
        %720 = vmatprep.subr.bf16.mxu0 0
        %721 = vmatpush1.bf16.msra.mxu0 0
        %722 = vmatprep.subr.bf16.mxu0 0
        %723 = vmatpush1.bf16.msra.mxu0 0
        %724 = vmatprep.subr.bf16.mxu0 0
        %725 = vmatpush1.bf16.msra.mxu0 0
        %726 = vmatprep.subr.bf16.mxu0 0
        %727 = vmatpush1.bf16.msra.mxu0 0
        %728 = vmatprep.subr.bf16.mxu0 0
        %729 = vmatpush1.bf16.msra.mxu0 0
        %730 = vmatprep.subr.bf16.mxu0 0
        %731 = vmatpush1.bf16.msra.mxu0 0
        %732 = vmatprep.subr.bf16.mxu0 0
        %733 = vmatpush1.bf16.msra.mxu0 0
        %734 = vmatprep.subr.bf16.mxu0 0
        %735 = vmatpush1.bf16.msra.mxu0 0
        %736 = vmatprep.subr.bf16.mxu0 0
        %737 = vmatpush1.bf16.msra.mxu0 0
        %738 = vmatprep.subr.bf16.mxu0 0
        %739 = vmatpush1.bf16.msra.mxu0 0
        %740 = vmatprep.mubr.bf16.mxu0 0
        %741 = vmatmul.mubr.bf16.gmra.mrb[0].mxu0 %v703
        %v742 = vpop.f32.mrb[0].mxu0
        %v743 = vadd.f32 %v675, %v742
        %v744 = vpop.f32.mrb[0].mxu0
        %v745 = vpop.f32.mrb[0].mxu0
        %v746 = vadd.f32 %v680, %v745
        %v747 = vpop.f32.mrb[0].mxu0
        %748 = vmatprep.mubr.bf16.mxu0 0
        %749 = vmatmul.mubr.bf16.gmra.mrb[0].mxu0 %v706
        %v750 = vpop.f32.mrb[0].mxu0
        %v751 = vadd.f32 %v685, %v750
        %v752 = vpop.f32.mrb[0].mxu0
        %v753 = vpop.f32.mrb[0].mxu0
        %v754 = vadd.f32 %v690, %v753
        %v755 = vpop.f32.mrb[0].mxu0
        %756 = vdwg.mxu0
        %v757 = vld [vmem:[#allocation14] sm:$0xf]
        %v758 = vld [vmem:[#allocation14 + $0x4] sm:$0xf]
        %v759 = vld [vmem:[#allocation14 + $0x8] sm:$0xf]
        %v760 = vld [vmem:[#allocation14 + $0xc] sm:$0xf]
        %v761 = vld [vmem:[%s482] sm:$0xff]
        %v762 = vld [vmem:[%s482 + $0x8] sm:$0xff]
        %v763 = vld [vmem:[%s482 + $0x10] sm:$0xff]
        %v764 = vld [vmem:[%s482 + $0x18] sm:$0xff]
        %v765 = vld [vmem:[%s482 + $0x20] sm:$0xff]
        %v766 = vld [vmem:[%s482 + $0x28] sm:$0xff]
        %v771 = vunpack.c.l.b16 %v757
        %v772 = vunpack.c.l.b16 %v758
        %v773 = vunpack.c.l.b16 %v759
        %v774 = vunpack.c.l.b16 %v760
        %v775 = vpack.c.b16 %v772, %v771
        %v776 = vpack.c.b16 %v774, %v773
        %v780 = vunpack.c.l.b16 %v761
        %v781 = vunpack.c.h.b16 %v761
        %v782 = vunpack.c.l.b16 %v762
        %v783 = vunpack.c.h.b16 %v762
        %v784 = vunpack.c.l.b16 %v763
        %v785 = vunpack.c.h.b16 %v763
        %v786 = vpack.c.b16 %v782, %v780
        %v787 = vpack.c.b16 %v783, %v781
        %v788 = vpack.c.b16 %v784, %v784
        %v789 = vpack.c.b16 %v785, %v785
        %vm792 = vcmask 195584
        %v794 = vsel %vm792, %v775, 0
        %v797 = vsel %vm792, %v776, 0
        %vm799 = vcmask 1043456
        %v801 = vsel %vm799, %v788, 0
        %v804 = vsel %vm799, %v789, 0
        %806 = vmatprep.subr.bf16.mxu0 %v787
        %807 = vmatpush1.bf16.msra.mxu0 %v786
        %808 = vmatprep.subr.bf16.mxu0 %v804
        %809 = vmatpush1.bf16.msra.mxu0 %v801
        %810 = vmatprep.subr.bf16.mxu0 0
        %811 = vmatpush1.bf16.msra.mxu0 0
        %812 = vmatprep.subr.bf16.mxu0 0
        %813 = vmatpush1.bf16.msra.mxu0 0
        %814 = vmatprep.subr.bf16.mxu0 0
        %815 = vmatpush1.bf16.msra.mxu0 0
        %816 = vmatprep.subr.bf16.mxu0 0
        %817 = vmatpush1.bf16.msra.mxu0 0
        %818 = vmatprep.subr.bf16.mxu0 0
        %819 = vmatpush1.bf16.msra.mxu0 0
        %820 = vmatprep.subr.bf16.mxu0 0
        %821 = vmatpush1.bf16.msra.mxu0 0
        %822 = vmatprep.subr.bf16.mxu0 0
        %823 = vmatpush1.bf16.msra.mxu0 0
        %824 = vmatprep.subr.bf16.mxu0 0
        %825 = vmatpush1.bf16.msra.mxu0 0
        %826 = vmatprep.subr.bf16.mxu0 0
        %827 = vmatpush1.bf16.msra.mxu0 0
        %828 = vmatprep.subr.bf16.mxu0 0
        %829 = vmatpush1.bf16.msra.mxu0 0
        %830 = vmatprep.subr.bf16.mxu0 0
        %831 = vmatpush1.bf16.msra.mxu0 0
        %832 = vmatprep.subr.bf16.mxu0 0
        %833 = vmatpush1.bf16.msra.mxu0 0
        %834 = vmatprep.subr.bf16.mxu0 0
        %835 = vmatpush1.bf16.msra.mxu0 0
        %836 = vmatprep.subr.bf16.mxu0 0
        %837 = vmatpush1.bf16.msra.mxu0 0
        %838 = vmatprep.mubr.bf16.mxu0 0
        %839 = vmatmul.mubr.bf16.gmra.mrb[0].mxu0 %v794
        %v840 = vpop.f32.mrb[0].mxu0
        %v841 = vadd.f32 0.0, %v840
        %v842 = vpop.f32.mrb[0].mxu0
        %v843 = vadd.f32 0.0, %v842
        %v844 = vpop.f32.mrb[0].mxu0
        %v845 = vadd.f32 0.0, %v844
        %v846 = vpop.f32.mrb[0].mxu0
        %v847 = vadd.f32 0.0, %v846
        %848 = vmatprep.mubr.bf16.mxu0 0
        %849 = vmatmul.mubr.bf16.gmra.mrb[0].mxu0 %v797
        %v850 = vpop.f32.mrb[0].mxu0
        %v851 = vadd.f32 0.0, %v850
        %v852 = vpop.f32.mrb[0].mxu0
        %v853 = vadd.f32 0.0, %v852
        %v854 = vpop.f32.mrb[0].mxu0
        %v855 = vadd.f32 0.0, %v854
        %v856 = vpop.f32.mrb[0].mxu0
        %v857 = vadd.f32 0.0, %v856
        %858 = vdwg.mxu0
        %v862 = vunpack.c.l.b16 %v764
        %v863 = vunpack.c.h.b16 %v764
        %v864 = vunpack.c.l.b16 %v765
        %v865 = vunpack.c.h.b16 %v765
        %v866 = vunpack.c.l.b16 %v766
        %v867 = vunpack.c.h.b16 %v766
        %v868 = vpack.c.b16 %v864, %v862
        %v869 = vpack.c.b16 %v865, %v863
        %v870 = vpack.c.b16 %v866, %v866
        %v871 = vpack.c.b16 %v867, %v867
        %v875 = vsel %vm799, %v870, 0
        %v878 = vsel %vm799, %v871, 0
        %880 = vmatprep.subr.bf16.mxu0 %v869
        %881 = vmatpush1.bf16.msra.mxu0 %v868
        %882 = vmatprep.subr.bf16.mxu0 %v878
        %883 = vmatpush1.bf16.msra.mxu0 %v875
        %884 = vmatprep.subr.bf16.mxu0 0
        %885 = vmatpush1.bf16.msra.mxu0 0
        %886 = vmatprep.subr.bf16.mxu0 0
        %887 = vmatpush1.bf16.msra.mxu0 0
        %888 = vmatprep.subr.bf16.mxu0 0
        %889 = vmatpush1.bf16.msra.mxu0 0
        %890 = vmatprep.subr.bf16.mxu0 0
        %891 = vmatpush1.bf16.msra.mxu0 0
        %892 = vmatprep.subr.bf16.mxu0 0
        %893 = vmatpush1.bf16.msra.mxu0 0
        %894 = vmatprep.subr.bf16.mxu0 0
        %895 = vmatpush1.bf16.msra.mxu0 0
        %896 = vmatprep.subr.bf16.mxu0 0
        %897 = vmatpush1.bf16.msra.mxu0 0
        %898 = vmatprep.subr.bf16.mxu0 0
        %899 = vmatpush1.bf16.msra.mxu0 0
        %900 = vmatprep.subr.bf16.mxu0 0
        %901 = vmatpush1.bf16.msra.mxu0 0
        %902 = vmatprep.subr.bf16.mxu0 0
        %903 = vmatpush1.bf16.msra.mxu0 0
        %904 = vmatprep.subr.bf16.mxu0 0
        %905 = vmatpush1.bf16.msra.mxu0 0
        %906 = vmatprep.subr.bf16.mxu0 0
        %907 = vmatpush1.bf16.msra.mxu0 0
        %908 = vmatprep.subr.bf16.mxu0 0
        %909 = vmatpush1.bf16.msra.mxu0 0
        %910 = vmatprep.subr.bf16.mxu0 0
        %911 = vmatpush1.bf16.msra.mxu0 0
        %912 = vmatprep.mubr.bf16.mxu0 0
        %913 = vmatmul.mubr.bf16.gmra.mrb[0].mxu0 %v794
        %v914 = vpop.f32.mrb[0].mxu0
        %v915 = vadd.f32 0.0, %v914
        %v916 = vpop.f32.mrb[0].mxu0
        %v917 = vadd.f32 0.0, %v916
        %v918 = vpop.f32.mrb[0].mxu0
        %v919 = vadd.f32 0.0, %v918
        %v920 = vpop.f32.mrb[0].mxu0
        %v921 = vadd.f32 0.0, %v920
        %922 = vmatprep.mubr.bf16.mxu0 0
        %923 = vmatmul.mubr.bf16.gmra.mrb[0].mxu0 %v797
        %v924 = vpop.f32.mrb[0].mxu0
        %v925 = vadd.f32 0.0, %v924
        %v926 = vpop.f32.mrb[0].mxu0
        %v927 = vadd.f32 0.0, %v926
        %v928 = vpop.f32.mrb[0].mxu0
        %v929 = vadd.f32 0.0, %v928
        %v930 = vpop.f32.mrb[0].mxu0
        %v931 = vadd.f32 0.0, %v930
        %932 = vdwg.mxu0
        %v933 = vld [vmem:[#allocation15] sm:$0xff]
        %v934 = vld [vmem:[#allocation15 + $0x8] sm:$0xff]
        %v935 = vld [vmem:[#allocation15 + $0x10] sm:$0xff]
        %v936 = vld [vmem:[#allocation15 + $0x18] sm:$0xff]
        %s937 = sld [smem:[#allocation2]]
        %v938 = vld [vmem:[#allocation17] sm:$0xff]
        %v939 = vld [vmem:[#allocation17 + $0x8] sm:$0xff]
        %v940 = vld [vmem:[#allocation17 + $0x10] sm:$0xff]
        %v941 = vld [vmem:[#allocation17 + $0x18] sm:$0xff]
        %v942 = vld [vmem:[#allocation17 + $0x20] sm:$0xff]
        %v943 = vld [vmem:[#allocation17 + $0x28] sm:$0xff]
        %v944 = vld [vmem:[#allocation17 + $0x30] sm:$0xff]
        %v945 = vld [vmem:[#allocation17 + $0x38] sm:$0xff]
        %v946 = vld [vmem:[#allocation17 + $0x40] sm:$0xff]
        %v947 = vld [vmem:[#allocation17 + $0x48] sm:$0xff]
        %v948 = vld [vmem:[#allocation17 + $0x50] sm:$0xff]
        %v949 = vld [vmem:[#allocation17 + $0x58] sm:$0xff]
        %v950 = vld [vmem:[#allocation17 + $0x60] sm:$0xff]
        %v951 = vld [vmem:[#allocation17 + $0x68] sm:$0xff]
        %v952 = vld [vmem:[#allocation17 + $0x70] sm:$0xff]
        %v953 = vld [vmem:[#allocation17 + $0x78] sm:$0xff]
        %v954 = vld [vmem:[#allocation17 + $0x80] sm:$0xff]
        %v955 = vld [vmem:[#allocation17 + $0x88] sm:$0xff]
        %v956 = vld [vmem:[#allocation17 + $0x90] sm:$0xff]
        %v957 = vld [vmem:[#allocation17 + $0x98] sm:$0xff]
        %v958 = vld [vmem:[#allocation17 + $0xa0] sm:$0xff]
        %v959 = vld [vmem:[#allocation17 + $0xa8] sm:$0xff]
        %v960 = vld [vmem:[#allocation17 + $0xb0] sm:$0xff]
        %v961 = vld [vmem:[#allocation17 + $0xb8] sm:$0xff]
        %v962 = vld [vmem:[#allocation17 + $0xc0] sm:$0xff]
        %v963 = vld [vmem:[#allocation17 + $0xc8] sm:$0xff]
        %v964 = vld [vmem:[#allocation17 + $0xd0] sm:$0xff]
        %v965 = vld [vmem:[#allocation17 + $0xd8] sm:$0xff]
        %v966 = vld [vmem:[#allocation17 + $0xe0] sm:$0xff]
        %v967 = vld [vmem:[#allocation17 + $0xe8] sm:$0xff]
        %v968 = vld [vmem:[#allocation17 + $0xf0] sm:$0xff]
        %v969 = vld [vmem:[#allocation17 + $0xf8] sm:$0xff]
        %v970 = vld [vmem:[#allocation17 + $0x100] sm:$0xff]
        %v971 = vld [vmem:[#allocation17 + $0x108] sm:$0xff]
        %v972 = vld [vmem:[#allocation17 + $0x110] sm:$0xff]
        %v973 = vld [vmem:[#allocation17 + $0x118] sm:$0xff]
        %v974 = vld [vmem:[#allocation17 + $0x120] sm:$0xff]
        %v975 = vld [vmem:[#allocation17 + $0x128] sm:$0xff]
        %v976 = vld [vmem:[#allocation17 + $0x130] sm:$0xff]
        %v977 = vld [vmem:[#allocation17 + $0x138] sm:$0xff]
        %v978 = vld [vmem:[#allocation17 + $0x140] sm:$0xff]
        %v979 = vld [vmem:[#allocation17 + $0x148] sm:$0xff]
        %v980 = vld [vmem:[#allocation17 + $0x150] sm:$0xff]
        %v981 = vld [vmem:[#allocation17 + $0x158] sm:$0xff]
        %v982 = vld [vmem:[#allocation17 + $0x160] sm:$0xff]
        %v983 = vld [vmem:[#allocation17 + $0x168] sm:$0xff]
        %v984 = vld [vmem:[#allocation17 + $0x170] sm:$0xff]
        %v985 = vld [vmem:[#allocation17 + $0x178] sm:$0xff]
        %v986 = vld [vmem:[#allocation17 + $0x180] sm:$0xff]
        %v987 = vld [vmem:[#allocation17 + $0x188] sm:$0xff]
        %v988 = vld [vmem:[#allocation17 + $0x190] sm:$0xff]
        %v989 = vld [vmem:[#allocation17 + $0x198] sm:$0xff]
        %v990 = vld [vmem:[#allocation17 + $0x1a0] sm:$0xff]
        %v991 = vld [vmem:[#allocation17 + $0x1a8] sm:$0xff]
        %v992 = vld [vmem:[#allocation17 + $0x1b0] sm:$0xff]
        %v993 = vld [vmem:[#allocation17 + $0x1b8] sm:$0xff]
        %v994 = vld [vmem:[#allocation18] sm:$0xff]
        %v995 = vld [vmem:[#allocation18 + $0x8] sm:$0xff]
        %v996 = vld [vmem:[#allocation18 + $0x10] sm:$0xff]
        %v997 = vld [vmem:[#allocation18 + $0x18] sm:$0xff]
        %v998 = vld [vmem:[#allocation18 + $0x20] sm:$0xff]
        %v999 = vld [vmem:[#allocation18 + $0x28] sm:$0xff]
        %v1000 = vld [vmem:[#allocation18 + $0x30] sm:$0xff]
        %v1001 = vld [vmem:[#allocation18 + $0x38] sm:$0xff]
        %v1002 = vld [vmem:[#allocation18 + $0x40] sm:$0xff]
        %v1003 = vld [vmem:[#allocation18 + $0x48] sm:$0xff]
        %v1004 = vld [vmem:[#allocation18 + $0x50] sm:$0xff]
        %v1005 = vld [vmem:[#allocation18 + $0x58] sm:$0xff]
        %v1006 = vld [vmem:[#allocation18 + $0x60] sm:$0xff]
        %v1007 = vld [vmem:[#allocation18 + $0x68] sm:$0xff]
        %v1008 = vld [vmem:[#allocation18 + $0x70] sm:$0xff]
        %v1009 = vld [vmem:[#allocation18 + $0x78] sm:$0xff]
        %v1010 = vld [vmem:[#allocation18 + $0x80] sm:$0xff]
        %v1011 = vld [vmem:[#allocation18 + $0x88] sm:$0xff]
        %v1012 = vld [vmem:[#allocation18 + $0x90] sm:$0xff]
        %v1013 = vld [vmem:[#allocation18 + $0x98] sm:$0xff]
        %v1014 = vld [vmem:[#allocation18 + $0xa0] sm:$0xff]
        %v1015 = vld [vmem:[#allocation18 + $0xa8] sm:$0xff]
        %v1016 = vld [vmem:[#allocation18 + $0xb0] sm:$0xff]
        %v1017 = vld [vmem:[#allocation18 + $0xb8] sm:$0xff]
        %v1018 = vld [vmem:[#allocation18 + $0xc0] sm:$0xff]
        %v1019 = vld [vmem:[#allocation18 + $0xc8] sm:$0xff]
        %v1020 = vld [vmem:[#allocation18 + $0xd0] sm:$0xff]
        %v1021 = vld [vmem:[#allocation18 + $0xd8] sm:$0xff]
        %v1022 = vld [vmem:[#allocation18 + $0xe0] sm:$0xff]
        %v1023 = vld [vmem:[#allocation18 + $0xe8] sm:$0xff]
        %v1024 = vld [vmem:[#allocation18 + $0xf0] sm:$0xff]
        %v1025 = vld [vmem:[#allocation18 + $0xf8] sm:$0xff]
        %v1026 = vld [vmem:[#allocation18 + $0x100] sm:$0xff]
        %v1027 = vld [vmem:[#allocation18 + $0x108] sm:$0xff]
        %v1028 = vld [vmem:[#allocation18 + $0x110] sm:$0xff]
        %v1029 = vld [vmem:[#allocation18 + $0x118] sm:$0xff]
        %v1030 = vld [vmem:[#allocation18 + $0x120] sm:$0xff]
        %v1031 = vld [vmem:[#allocation18 + $0x128] sm:$0xff]
        %v1032 = vld [vmem:[#allocation18 + $0x130] sm:$0xff]
        %v1033 = vld [vmem:[#allocation18 + $0x138] sm:$0xff]
        %v1034 = vld [vmem:[#allocation18 + $0x140] sm:$0xff]
        %v1035 = vld [vmem:[#allocation18 + $0x148] sm:$0xff]
        %v1036 = vld [vmem:[#allocation18 + $0x150] sm:$0xff]
        %v1037 = vld [vmem:[#allocation18 + $0x158] sm:$0xff]
        %v1038 = vld [vmem:[#allocation18 + $0x160] sm:$0xff]
        %v1039 = vld [vmem:[#allocation18 + $0x168] sm:$0xff]
        %v1040 = vld [vmem:[#allocation18 + $0x170] sm:$0xff]
        %v1041 = vld [vmem:[#allocation18 + $0x178] sm:$0xff]
        %v1042 = vld [vmem:[#allocation18 + $0x180] sm:$0xff]
        %v1043 = vld [vmem:[#allocation18 + $0x188] sm:$0xff]
        %v1044 = vld [vmem:[#allocation18 + $0x190] sm:$0xff]
        %v1045 = vld [vmem:[#allocation18 + $0x198] sm:$0xff]
        %v1046 = vld [vmem:[#allocation18 + $0x1a0] sm:$0xff]
        %v1047 = vld [vmem:[#allocation18 + $0x1a8] sm:$0xff]
        %v1048 = vld [vmem:[#allocation18 + $0x1b0] sm:$0xff]
        %v1049 = vld [vmem:[#allocation18 + $0x1b8] sm:$0xff]
        %v1050 = vld [vmem:[#allocation18 + $0x1c0] sm:$0xff]
        %v1051 = vld [vmem:[#allocation18 + $0x1c8] sm:$0xff]
        %v1052 = vld [vmem:[#allocation18 + $0x1d0] sm:$0xff]
        %v1053 = vld [vmem:[#allocation18 + $0x1d8] sm:$0xff]
        %v1054 = vld [vmem:[#allocation18 + $0x1e0] sm:$0xff]
        %v1055 = vld [vmem:[#allocation18 + $0x1e8] sm:$0xff]
        %v1056 = vld [vmem:[#allocation18 + $0x1f0] sm:$0xff]
        %v1057 = vld [vmem:[#allocation18 + $0x1f8] sm:$0xff]
        %1059 = vset.pattern.permute.xlu0 0
        %1060 = vperm.xlu0 %1059, %v743
        %v1061 = vpop.permute.xlu0 %1060
        %1064 = vset.pattern.permute.xlu0 0
        %1065 = vperm.xlu0 %1064, %v746
        %v1066 = vpop.permute.xlu0 %1065
        %1069 = vset.pattern.permute.xlu0 0
        %1070 = vperm.xlu0 %1069, %v751
        %v1071 = vpop.permute.xlu0 %1070
        %1074 = vset.pattern.permute.xlu0 0
        %1075 = vperm.xlu0 %1074, %v754
        %v1076 = vpop.permute.xlu0 %1075
        %v1078 = vadd.f32 %v841, %v1061
        %v1079 = vadd.f32 %v843, %v1061
        %v1080 = vadd.f32 %v845, %v1066
        %v1081 = vadd.f32 %v847, %v1066
        %v1082 = vadd.f32 %v851, %v1071
        %v1083 = vadd.f32 %v853, %v1071
        %v1084 = vadd.f32 %v855, %v1076
        %v1085 = vadd.f32 %v857, %v1076
        %v1086 = vmax.f32 %v1078, 0.0
        %v1087 = vmax.f32 %v1079, 0.0
        %v1088 = vmax.f32 %v1080, 0.0
        %v1089 = vmax.f32 %v1081, 0.0
        %v1090 = vmax.f32 %v1082, 0.0
        %v1091 = vmax.f32 %v1083, 0.0
        %v1092 = vmax.f32 %v1084, 0.0
        %v1093 = vmax.f32 %v1085, 0.0
        %1095 = vset.pattern.permute.xlu0 0
        %1096 = vperm.xlu0 %1095, %v933
        %v1097 = vpop.permute.xlu0 %1096
        %1100 = vset.pattern.permute.xlu0 0
        %1101 = vperm.xlu0 %1100, %v934
        %v1102 = vpop.permute.xlu0 %1101
        %1105 = vset.pattern.permute.xlu0 0
        %1106 = vperm.xlu0 %1105, %v935
        %v1107 = vpop.permute.xlu0 %1106
        %1110 = vset.pattern.permute.xlu0 0
        %1111 = vperm.xlu0 %1110, %v936
        %v1112 = vpop.permute.xlu0 %1111
        %v1114 = vmul.f32 %v1086, %v1097
        %v1115 = vmul.f32 %v1087, %v1097
        %v1116 = vmul.f32 %v1088, %v1102
        %v1117 = vmul.f32 %v1089, %v1102
        %v1118 = vmul.f32 %v1090, %v1107
        %v1119 = vmul.f32 %v1091, %v1107
        %v1120 = vmul.f32 %v1092, %v1112
        %v1121 = vmul.f32 %v1093, %v1112
        %v1122 = vadd.f32 %v1114, %v1116
        %v1123 = vadd.f32 %v1122, %v1118
        %v1124 = vadd.f32 %v1123, %v1120
        %v1125 = vrot.slane %v1124, 4
        %v1126 = vadd.f32 %v1124, %v1125
        %v1127 = vrot.slane %v1126, 2
        %v1128 = vadd.f32 %v1126, %v1127
        %v1129 = vrot.slane %v1128, 1
        %v1130 = vadd.f32 %v1128, %v1129
        %v1131 = vadd.f32 %v1115, %v1117
        %v1132 = vadd.f32 %v1131, %v1119
        %v1133 = vadd.f32 %v1132, %v1121
        %v1134 = vrot.slane %v1133, 4
        %v1135 = vadd.f32 %v1133, %v1134
        %v1136 = vrot.slane %v1135, 2
        %v1137 = vadd.f32 %v1135, %v1136
        %v1138 = vrot.slane %v1137, 1
        %v1139 = vadd.f32 %v1137, %v1138
        %v1140 = vmul.f32 %v938, %v1130
        %v1141 = vmul.f32 %v939, %v1139
        %v1142 = vmul.f32 %v940, %v1130
        %v1143 = vmul.f32 %v941, %v1139
        %v1144 = vmul.f32 %v942, %v1130
        %v1145 = vmul.f32 %v943, %v1139
        %v1146 = vmul.f32 %v944, %v1130
        %v1147 = vmul.f32 %v945, %v1139
        %v1148 = vmul.f32 %v946, %v1130
        %v1149 = vmul.f32 %v947, %v1139
        %v1150 = vmul.f32 %v948, %v1130
        %v1151 = vmul.f32 %v949, %v1139
        %v1152 = vmul.f32 %v950, %v1130
        %v1153 = vmul.f32 %v951, %v1139
        %v1154 = vmul.f32 %v952, %v1130
        %v1155 = vmul.f32 %v953, %v1139
        %v1156 = vmul.f32 %v954, %v1130
        %v1157 = vmul.f32 %v955, %v1139
        %v1158 = vmul.f32 %v956, %v1130
        %v1159 = vmul.f32 %v957, %v1139
        %v1160 = vmul.f32 %v958, %v1130
        %v1161 = vmul.f32 %v959, %v1139
        %v1162 = vmul.f32 %v960, %v1130
        %v1163 = vmul.f32 %v961, %v1139
        %v1164 = vmul.f32 %v962, %v1130
        %v1165 = vmul.f32 %v963, %v1139
        %v1166 = vmul.f32 %v964, %v1130
        %v1167 = vmul.f32 %v965, %v1139
        %v1168 = vmul.f32 %v966, %v1130
        %v1169 = vmul.f32 %v967, %v1139
        %v1170 = vmul.f32 %v968, %v1130
        %v1171 = vmul.f32 %v969, %v1139
        %v1172 = vmul.f32 %v970, %v1130
        %v1173 = vmul.f32 %v971, %v1139
        %v1174 = vmul.f32 %v972, %v1130
        %v1175 = vmul.f32 %v973, %v1139
        %v1176 = vmul.f32 %v974, %v1130
        %v1177 = vmul.f32 %v975, %v1139
        %v1178 = vmul.f32 %v976, %v1130
        %v1179 = vmul.f32 %v977, %v1139
        %v1180 = vmul.f32 %v978, %v1130
        %v1181 = vmul.f32 %v979, %v1139
        %v1182 = vmul.f32 %v980, %v1130
        %v1183 = vmul.f32 %v981, %v1139
        %v1184 = vmul.f32 %v982, %v1130
        %v1185 = vmul.f32 %v983, %v1139
        %v1186 = vmul.f32 %v984, %v1130
        %v1187 = vmul.f32 %v985, %v1139
        %v1188 = vmul.f32 %v986, %v1130
        %v1189 = vmul.f32 %v987, %v1139
        %v1190 = vmul.f32 %v988, %v1130
        %v1191 = vmul.f32 %v989, %v1139
        %v1192 = vmul.f32 %v990, %v1130
        %v1193 = vmul.f32 %v991, %v1139
        %v1194 = vmul.f32 %v992, %v1130
        %v1195 = vmul.f32 %v993, %v1139
        %v1196 = vstv %s937
        %1197 = vmatprep.subr.mxu0 %v995
        %1198 = vmatpush1.msra.mxu0 %v994
        %1199 = vmatprep.subr.mxu0 %v997
        %1200 = vmatpush1.msra.mxu0 %v996
        %1201 = vmatprep.subr.mxu0 %v999
        %1202 = vmatpush1.msra.mxu0 %v998
        %1203 = vmatprep.subr.mxu0 %v1001
        %1204 = vmatpush1.msra.mxu0 %v1000
        %1205 = vmatprep.subr.mxu0 %v1003
        %1206 = vmatpush1.msra.mxu0 %v1002
        %1207 = vmatprep.subr.mxu0 %v1005
        %1208 = vmatpush1.msra.mxu0 %v1004
        %1209 = vmatprep.subr.mxu0 %v1007
        %1210 = vmatpush1.msra.mxu0 %v1006
        %1211 = vmatprep.subr.mxu0 %v1009
        %1212 = vmatpush1.msra.mxu0 %v1008
        %1213 = vmatprep.subr.mxu0 %v1011
        %1214 = vmatpush1.msra.mxu0 %v1010
        %1215 = vmatprep.subr.mxu0 %v1013
        %1216 = vmatpush1.msra.mxu0 %v1012
        %1217 = vmatprep.subr.mxu0 %v1015
        %1218 = vmatpush1.msra.mxu0 %v1014
        %1219 = vmatprep.subr.mxu0 %v1017
        %1220 = vmatpush1.msra.mxu0 %v1016
        %1221 = vmatprep.subr.mxu0 %v1019
        %1222 = vmatpush1.msra.mxu0 %v1018
        %1223 = vmatprep.subr.mxu0 %v1021
        %1224 = vmatpush1.msra.mxu0 %v1020
        %1225 = vmatprep.subr.mxu0 %v1023
        %1226 = vmatpush1.msra.mxu0 %v1022
        %1227 = vmatprep.subr.mxu0 %v1025
        %1228 = vmatpush1.msra.mxu0 %v1024
        %1229 = vmatprep.subr.mxu0 %v1027
        %1230 = vmatpush1.msra.mxu0 %v1026
        %1231 = vmatprep.subr.mxu0 %v1029
        %1232 = vmatpush1.msra.mxu0 %v1028
        %1233 = vmatprep.subr.mxu0 %v1031
        %1234 = vmatpush1.msra.mxu0 %v1030
        %1235 = vmatprep.subr.mxu0 %v1033
        %1236 = vmatpush1.msra.mxu0 %v1032
        %1237 = vmatprep.subr.mxu0 %v1035
        %1238 = vmatpush1.msra.mxu0 %v1034
        %1239 = vmatprep.subr.mxu0 %v1037
        %1240 = vmatpush1.msra.mxu0 %v1036
        %1241 = vmatprep.subr.mxu0 %v1039
        %1242 = vmatpush1.msra.mxu0 %v1038
        %1243 = vmatprep.subr.mxu0 %v1041
        %1244 = vmatpush1.msra.mxu0 %v1040
        %1245 = vmatprep.subr.mxu0 %v1043
        %1246 = vmatpush1.msra.mxu0 %v1042
        %1247 = vmatprep.subr.mxu0 %v1045
        %1248 = vmatpush1.msra.mxu0 %v1044
        %1249 = vmatprep.subr.mxu0 %v1047
        %1250 = vmatpush1.msra.mxu0 %v1046
        %1251 = vmatprep.subr.mxu0 %v1049
        %1252 = vmatpush1.msra.mxu0 %v1048
        %1253 = vmatprep.subr.mxu0 %v1051
        %1254 = vmatpush1.msra.mxu0 %v1050
        %1255 = vmatprep.subr.mxu0 %v1053
        %1256 = vmatpush1.msra.mxu0 %v1052
        %1257 = vmatprep.subr.mxu0 %v1055
        %1258 = vmatpush1.msra.mxu0 %v1054
        %1259 = vmatprep.subr.mxu0 %v1057
        %1260 = vmatpush1.msra.mxu0 %v1056
        %1261 = vmatprep.mubr.f32.mxu0 %v1141
        %1262 = vmatmul.mubr.f32.gmra.mrb[0].mxu0 %v1140
        %v1263 = vpop.f32.mrb[0].mxu0
        %v1264 = vadd.f32 %v1196, %v1263
        %v1265 = vpop.f32.mrb[0].mxu0
        %v1266 = vadd.f32 %v1196, %v1265
        %1267 = vmatprep.mubr.f32.mxu0 %v1143
        %1268 = vmatmul.mubr.f32.gmra.mrb[0].mxu0 %v1142
        %v1269 = vpop.f32.mrb[0].mxu0
        %v1270 = vadd.f32 %v1196, %v1269
        %v1271 = vpop.f32.mrb[0].mxu0
        %v1272 = vadd.f32 %v1196, %v1271
        %1273 = vmatprep.mubr.f32.mxu0 %v1145
        %1274 = vmatmul.mubr.f32.gmra.mrb[0].mxu0 %v1144
        %v1275 = vpop.f32.mrb[0].mxu0
        %v1276 = vadd.f32 %v1196, %v1275
        %v1277 = vpop.f32.mrb[0].mxu0
        %v1278 = vadd.f32 %v1196, %v1277
        %1279 = vmatprep.mubr.f32.mxu0 %v1147
        %1280 = vmatmul.mubr.f32.gmra.mrb[0].mxu0 %v1146
        %v1281 = vpop.f32.mrb[0].mxu0
        %v1282 = vadd.f32 %v1196, %v1281
        %v1283 = vpop.f32.mrb[0].mxu0
        %v1284 = vadd.f32 %v1196, %v1283
        %1285 = vmatprep.mubr.f32.mxu0 %v1149
        %1286 = vmatmul.mubr.f32.gmra.mrb[0].mxu0 %v1148
        %v1287 = vpop.f32.mrb[0].mxu0
        %v1288 = vadd.f32 %v1196, %v1287
        %v1289 = vpop.f32.mrb[0].mxu0
        %v1290 = vadd.f32 %v1196, %v1289
        %1291 = vmatprep.mubr.f32.mxu0 %v1151
        %1292 = vmatmul.mubr.f32.gmra.mrb[0].mxu0 %v1150
        %v1293 = vpop.f32.mrb[0].mxu0
        %v1294 = vadd.f32 %v1196, %v1293
        %v1295 = vpop.f32.mrb[0].mxu0
        %v1296 = vadd.f32 %v1196, %v1295
        %1297 = vmatprep.mubr.f32.mxu0 %v1153
        %1298 = vmatmul.mubr.f32.gmra.mrb[0].mxu0 %v1152
        %v1299 = vpop.f32.mrb[0].mxu0
        %v1300 = vadd.f32 %v1196, %v1299
        %v1301 = vpop.f32.mrb[0].mxu0
        %v1302 = vadd.f32 %v1196, %v1301
        %1303 = vmatprep.mubr.f32.mxu0 %v1155
        %1304 = vmatmul.mubr.f32.gmra.mrb[0].mxu0 %v1154
        %v1305 = vpop.f32.mrb[0].mxu0
        %v1306 = vadd.f32 %v1196, %v1305
        %v1307 = vpop.f32.mrb[0].mxu0
        %v1308 = vadd.f32 %v1196, %v1307
        %1309 = vmatprep.mubr.f32.mxu0 %v1157
        %1310 = vmatmul.mubr.f32.gmra.mrb[0].mxu0 %v1156
        %v1311 = vpop.f32.mrb[0].mxu0
        %v1312 = vadd.f32 %v1196, %v1311
        %v1313 = vpop.f32.mrb[0].mxu0
        %v1314 = vadd.f32 %v1196, %v1313
        %1315 = vmatprep.mubr.f32.mxu0 %v1159
        %1316 = vmatmul.mubr.f32.gmra.mrb[0].mxu0 %v1158
        %v1317 = vpop.f32.mrb[0].mxu0
        %v1318 = vadd.f32 %v1196, %v1317
        %v1319 = vpop.f32.mrb[0].mxu0
        %v1320 = vadd.f32 %v1196, %v1319
        %1321 = vmatprep.mubr.f32.mxu0 %v1161
        %1322 = vmatmul.mubr.f32.gmra.mrb[0].mxu0 %v1160
        %v1323 = vpop.f32.mrb[0].mxu0
        %v1324 = vadd.f32 %v1196, %v1323
        %v1325 = vpop.f32.mrb[0].mxu0
        %v1326 = vadd.f32 %v1196, %v1325
        %1327 = vmatprep.mubr.f32.mxu0 %v1163
        %1328 = vmatmul.mubr.f32.gmra.mrb[0].mxu0 %v1162
        %v1329 = vpop.f32.mrb[0].mxu0
        %v1330 = vadd.f32 %v1196, %v1329
        %v1331 = vpop.f32.mrb[0].mxu0
        %v1332 = vadd.f32 %v1196, %v1331
        %1333 = vmatprep.mubr.f32.mxu0 %v1165
        %1334 = vmatmul.mubr.f32.gmra.mrb[0].mxu0 %v1164
        %v1335 = vpop.f32.mrb[0].mxu0
        %v1336 = vadd.f32 %v1196, %v1335
        %v1337 = vpop.f32.mrb[0].mxu0
        %v1338 = vadd.f32 %v1196, %v1337
        %1339 = vmatprep.mubr.f32.mxu0 %v1167
        %1340 = vmatmul.mubr.f32.gmra.mrb[0].mxu0 %v1166
        %v1341 = vpop.f32.mrb[0].mxu0
        %v1342 = vadd.f32 %v1196, %v1341
        %v1343 = vpop.f32.mrb[0].mxu0
        %v1344 = vadd.f32 %v1196, %v1343
        %1345 = vmatprep.mubr.f32.mxu0 %v1169
        %1346 = vmatmul.mubr.f32.gmra.mrb[0].mxu0 %v1168
        %v1347 = vpop.f32.mrb[0].mxu0
        %v1348 = vadd.f32 %v1196, %v1347
        %v1349 = vpop.f32.mrb[0].mxu0
        %v1350 = vadd.f32 %v1196, %v1349
        %1351 = vmatprep.mubr.f32.mxu0 %v1171
        %1352 = vmatmul.mubr.f32.gmra.mrb[0].mxu0 %v1170
        %v1353 = vpop.f32.mrb[0].mxu0
        %v1354 = vadd.f32 %v1196, %v1353
        %v1355 = vpop.f32.mrb[0].mxu0
        %v1356 = vadd.f32 %v1196, %v1355
        %1357 = vmatprep.mubr.f32.mxu0 %v1173
        %1358 = vmatmul.mubr.f32.gmra.mrb[0].mxu0 %v1172
        %v1359 = vpop.f32.mrb[0].mxu0
        %v1360 = vadd.f32 %v1196, %v1359
        %v1361 = vpop.f32.mrb[0].mxu0
        %v1362 = vadd.f32 %v1196, %v1361
        %1363 = vmatprep.mubr.f32.mxu0 %v1175
        %1364 = vmatmul.mubr.f32.gmra.mrb[0].mxu0 %v1174
        %v1365 = vpop.f32.mrb[0].mxu0
        %v1366 = vadd.f32 %v1196, %v1365
        %v1367 = vpop.f32.mrb[0].mxu0
        %v1368 = vadd.f32 %v1196, %v1367
        %1369 = vmatprep.mubr.f32.mxu0 %v1177
        %1370 = vmatmul.mubr.f32.gmra.mrb[0].mxu0 %v1176
        %v1371 = vpop.f32.mrb[0].mxu0
        %v1372 = vadd.f32 %v1196, %v1371
        %v1373 = vpop.f32.mrb[0].mxu0
        %v1374 = vadd.f32 %v1196, %v1373
        %1375 = vmatprep.mubr.f32.mxu0 %v1179
        %1376 = vmatmul.mubr.f32.gmra.mrb[0].mxu0 %v1178
        %v1377 = vpop.f32.mrb[0].mxu0
        %v1378 = vadd.f32 %v1196, %v1377
        %v1379 = vpop.f32.mrb[0].mxu0
        %v1380 = vadd.f32 %v1196, %v1379
        %1381 = vmatprep.mubr.f32.mxu0 %v1181
        %1382 = vmatmul.mubr.f32.gmra.mrb[0].mxu0 %v1180
        %v1383 = vpop.f32.mrb[0].mxu0
        %v1384 = vadd.f32 %v1196, %v1383
        %v1385 = vpop.f32.mrb[0].mxu0
        %v1386 = vadd.f32 %v1196, %v1385
        %1387 = vmatprep.mubr.f32.mxu0 %v1183
        %1388 = vmatmul.mubr.f32.gmra.mrb[0].mxu0 %v1182
        %v1389 = vpop.f32.mrb[0].mxu0
        %v1390 = vadd.f32 %v1196, %v1389
        %v1391 = vpop.f32.mrb[0].mxu0
        %v1392 = vadd.f32 %v1196, %v1391
        %1393 = vmatprep.mubr.f32.mxu0 %v1185
        %1394 = vmatmul.mubr.f32.gmra.mrb[0].mxu0 %v1184
        %v1395 = vpop.f32.mrb[0].mxu0
        %v1396 = vadd.f32 %v1196, %v1395
        %v1397 = vpop.f32.mrb[0].mxu0
        %v1398 = vadd.f32 %v1196, %v1397
        %1399 = vmatprep.mubr.f32.mxu0 %v1187
        %1400 = vmatmul.mubr.f32.gmra.mrb[0].mxu0 %v1186
        %v1401 = vpop.f32.mrb[0].mxu0
        %v1402 = vadd.f32 %v1196, %v1401
        %v1403 = vpop.f32.mrb[0].mxu0
        %v1404 = vadd.f32 %v1196, %v1403
        %1405 = vmatprep.mubr.f32.mxu0 %v1189
        %1406 = vmatmul.mubr.f32.gmra.mrb[0].mxu0 %v1188
        %v1407 = vpop.f32.mrb[0].mxu0
        %v1408 = vadd.f32 %v1196, %v1407
        %v1409 = vpop.f32.mrb[0].mxu0
        %v1410 = vadd.f32 %v1196, %v1409
        %1411 = vmatprep.mubr.f32.mxu0 %v1191
        %1412 = vmatmul.mubr.f32.gmra.mrb[0].mxu0 %v1190
        %v1413 = vpop.f32.mrb[0].mxu0
        %v1414 = vadd.f32 %v1196, %v1413
        %v1415 = vpop.f32.mrb[0].mxu0
        %v1416 = vadd.f32 %v1196, %v1415
        %1417 = vmatprep.mubr.f32.mxu0 %v1193
        %1418 = vmatmul.mubr.f32.gmra.mrb[0].mxu0 %v1192
        %v1419 = vpop.f32.mrb[0].mxu0
        %v1420 = vadd.f32 %v1196, %v1419
        %v1421 = vpop.f32.mrb[0].mxu0
        %v1422 = vadd.f32 %v1196, %v1421
        %1423 = vmatprep.mubr.f32.mxu0 %v1195
        %1424 = vmatmul.mubr.f32.gmra.mrb[0].mxu0 %v1194
        %v1425 = vpop.f32.mrb[0].mxu0
        %v1426 = vadd.f32 %v1196, %v1425
        %v1427 = vpop.f32.mrb[0].mxu0
        %v1428 = vadd.f32 %v1196, %v1427
        %1429 = vdwg.mxu0
        %1430 = vst [vmem:[%s556] sm:$0xff] %v1264
        %vm1431 = vcmask 785408
        %1432 = vst.msk [vmem:[%s556 + $0x8] sm:$0xff] %vm1431, %v1266
        %1433 = vst [vmem:[%s556 + $0x10] sm:$0xff] %v1270
        %1434 = vst.msk [vmem:[%s556 + $0x18] sm:$0xff] %vm1431, %v1272
        %1435 = vst [vmem:[%s556 + $0x20] sm:$0xff] %v1276
        %1436 = vst.msk [vmem:[%s556 + $0x28] sm:$0xff] %vm1431, %v1278
        %1437 = vst [vmem:[%s556 + $0x30] sm:$0xff] %v1282
        %1438 = vst.msk [vmem:[%s556 + $0x38] sm:$0xff] %vm1431, %v1284
        %1439 = vst [vmem:[%s556 + $0x40] sm:$0xff] %v1288
        %1440 = vst.msk [vmem:[%s556 + $0x48] sm:$0xff] %vm1431, %v1290
        %1441 = vst [vmem:[%s556 + $0x50] sm:$0xff] %v1294
        %1442 = vst.msk [vmem:[%s556 + $0x58] sm:$0xff] %vm1431, %v1296
        %1443 = vst [vmem:[%s556 + $0x60] sm:$0xff] %v1300
        %1444 = vst.msk [vmem:[%s556 + $0x68] sm:$0xff] %vm1431, %v1302
        %1445 = vst [vmem:[%s556 + $0x70] sm:$0xff] %v1306
        %1446 = vst.msk [vmem:[%s556 + $0x78] sm:$0xff] %vm1431, %v1308
        %1447 = vst [vmem:[%s556 + $0x80] sm:$0xff] %v1312
        %1448 = vst.msk [vmem:[%s556 + $0x88] sm:$0xff] %vm1431, %v1314
        %1449 = vst [vmem:[%s556 + $0x90] sm:$0xff] %v1318
        %1450 = vst.msk [vmem:[%s556 + $0x98] sm:$0xff] %vm1431, %v1320
        %1451 = vst [vmem:[%s556 + $0xa0] sm:$0xff] %v1324
        %1452 = vst.msk [vmem:[%s556 + $0xa8] sm:$0xff] %vm1431, %v1326
        %1453 = vst [vmem:[%s556 + $0xb0] sm:$0xff] %v1330
        %1454 = vst.msk [vmem:[%s556 + $0xb8] sm:$0xff] %vm1431, %v1332
        %1455 = vst [vmem:[%s556 + $0xc0] sm:$0xff] %v1336
        %1456 = vst.msk [vmem:[%s556 + $0xc8] sm:$0xff] %vm1431, %v1338
        %1457 = vst [vmem:[%s556 + $0xd0] sm:$0xff] %v1342
        %1458 = vst.msk [vmem:[%s556 + $0xd8] sm:$0xff] %vm1431, %v1344
        %1459 = vst [vmem:[%s556 + $0xe0] sm:$0xff] %v1348
        %1460 = vst.msk [vmem:[%s556 + $0xe8] sm:$0xff] %vm1431, %v1350
        %1461 = vst [vmem:[%s556 + $0xf0] sm:$0xff] %v1354
        %1462 = vst.msk [vmem:[%s556 + $0xf8] sm:$0xff] %vm1431, %v1356
        %1463 = vst [vmem:[%s556 + $0x100] sm:$0xff] %v1360
        %1464 = vst.msk [vmem:[%s556 + $0x108] sm:$0xff] %vm1431, %v1362
        %1465 = vst [vmem:[%s556 + $0x110] sm:$0xff] %v1366
        %1466 = vst.msk [vmem:[%s556 + $0x118] sm:$0xff] %vm1431, %v1368
        %1467 = vst [vmem:[%s556 + $0x120] sm:$0xff] %v1372
        %1468 = vst.msk [vmem:[%s556 + $0x128] sm:$0xff] %vm1431, %v1374
        %1469 = vst [vmem:[%s556 + $0x130] sm:$0xff] %v1378
        %1470 = vst.msk [vmem:[%s556 + $0x138] sm:$0xff] %vm1431, %v1380
        %1471 = vst [vmem:[%s556 + $0x140] sm:$0xff] %v1384
        %1472 = vst.msk [vmem:[%s556 + $0x148] sm:$0xff] %vm1431, %v1386
        %1473 = vst [vmem:[%s556 + $0x150] sm:$0xff] %v1390
        %1474 = vst.msk [vmem:[%s556 + $0x158] sm:$0xff] %vm1431, %v1392
        %1475 = vst [vmem:[%s556 + $0x160] sm:$0xff] %v1396
        %1476 = vst.msk [vmem:[%s556 + $0x168] sm:$0xff] %vm1431, %v1398
        %1477 = vst [vmem:[%s556 + $0x170] sm:$0xff] %v1402
        %1478 = vst.msk [vmem:[%s556 + $0x178] sm:$0xff] %vm1431, %v1404
        %1479 = vst [vmem:[%s556 + $0x180] sm:$0xff] %v1408
        %1480 = vst.msk [vmem:[%s556 + $0x188] sm:$0xff] %vm1431, %v1410
        %1481 = vst [vmem:[%s556 + $0x190] sm:$0xff] %v1414
        %1482 = vst.msk [vmem:[%s556 + $0x198] sm:$0xff] %vm1431, %v1416
        %1483 = vst [vmem:[%s556 + $0x1a0] sm:$0xff] %v1420
        %1484 = vst.msk [vmem:[%s556 + $0x1a8] sm:$0xff] %vm1431, %v1422
        %1485 = vst [vmem:[%s556 + $0x1b0] sm:$0xff] %v1426
        %1486 = vst.msk [vmem:[%s556 + $0x1b8] sm:$0xff] %vm1431, %v1428
        %1487 = vset.pattern.permute.xlu0 1
        %1488 = vperm.xlu0 %1487, %v743
        %v1489 = vpop.permute.xlu0 %1488
        %1491 = vset.pattern.permute.xlu0 1
        %1492 = vperm.xlu0 %1491, %v746
        %v1493 = vpop.permute.xlu0 %1492
        %1495 = vset.pattern.permute.xlu0 1
        %1496 = vperm.xlu0 %1495, %v751
        %v1497 = vpop.permute.xlu0 %1496
        %1499 = vset.pattern.permute.xlu0 1
        %1500 = vperm.xlu0 %1499, %v754
        %v1501 = vpop.permute.xlu0 %1500
        %v1503 = vadd.f32 %v915, %v1489
        %v1504 = vadd.f32 %v917, %v1489
        %v1505 = vadd.f32 %v919, %v1493
        %v1506 = vadd.f32 %v921, %v1493
        %v1507 = vadd.f32 %v925, %v1497
        %v1508 = vadd.f32 %v927, %v1497
        %v1509 = vadd.f32 %v929, %v1501
        %v1510 = vadd.f32 %v931, %v1501
        %v1511 = vmax.f32 %v1503, 0.0
        %v1512 = vmax.f32 %v1504, 0.0
        %v1513 = vmax.f32 %v1505, 0.0
        %v1514 = vmax.f32 %v1506, 0.0
        %v1515 = vmax.f32 %v1507, 0.0
        %v1516 = vmax.f32 %v1508, 0.0
        %v1517 = vmax.f32 %v1509, 0.0
        %v1518 = vmax.f32 %v1510, 0.0
        %v1519 = vmul.f32 %v1511, %v1097
        %v1520 = vmul.f32 %v1512, %v1097
        %v1521 = vmul.f32 %v1513, %v1102
        %v1522 = vmul.f32 %v1514, %v1102
        %v1523 = vmul.f32 %v1515, %v1107
        %v1524 = vmul.f32 %v1516, %v1107
        %v1525 = vmul.f32 %v1517, %v1112
        %v1526 = vmul.f32 %v1518, %v1112
        %v1527 = vadd.f32 %v1519, %v1521
        %v1528 = vadd.f32 %v1527, %v1523
        %v1529 = vadd.f32 %v1528, %v1525
        %v1530 = vrot.slane %v1529, 4
        %v1531 = vadd.f32 %v1529, %v1530
        %v1532 = vrot.slane %v1531, 2
        %v1533 = vadd.f32 %v1531, %v1532
        %v1534 = vrot.slane %v1533, 1
        %v1535 = vadd.f32 %v1533, %v1534
        %v1536 = vadd.f32 %v1520, %v1522
        %v1537 = vadd.f32 %v1536, %v1524
        %v1538 = vadd.f32 %v1537, %v1526
        %v1539 = vrot.slane %v1538, 4
        %v1540 = vadd.f32 %v1538, %v1539
        %v1541 = vrot.slane %v1540, 2
        %v1542 = vadd.f32 %v1540, %v1541
        %v1543 = vrot.slane %v1542, 1
        %v1544 = vadd.f32 %v1542, %v1543
        %v1545 = vmul.f32 %v938, %v1535
        %v1546 = vmul.f32 %v939, %v1544
        %v1547 = vmul.f32 %v940, %v1535
        %v1548 = vmul.f32 %v941, %v1544
        %v1549 = vmul.f32 %v942, %v1535
        %v1550 = vmul.f32 %v943, %v1544
        %v1551 = vmul.f32 %v944, %v1535
        %v1552 = vmul.f32 %v945, %v1544
        %v1553 = vmul.f32 %v946, %v1535
        %v1554 = vmul.f32 %v947, %v1544
        %v1555 = vmul.f32 %v948, %v1535
        %v1556 = vmul.f32 %v949, %v1544
        %v1557 = vmul.f32 %v950, %v1535
        %v1558 = vmul.f32 %v951, %v1544
        %v1559 = vmul.f32 %v952, %v1535
        %v1560 = vmul.f32 %v953, %v1544
        %v1561 = vmul.f32 %v954, %v1535
        %v1562 = vmul.f32 %v955, %v1544
        %v1563 = vmul.f32 %v956, %v1535
        %v1564 = vmul.f32 %v957, %v1544
        %v1565 = vmul.f32 %v958, %v1535
        %v1566 = vmul.f32 %v959, %v1544
        %v1567 = vmul.f32 %v960, %v1535
        %v1568 = vmul.f32 %v961, %v1544
        %v1569 = vmul.f32 %v962, %v1535
        %v1570 = vmul.f32 %v963, %v1544
        %v1571 = vmul.f32 %v964, %v1535
        %v1572 = vmul.f32 %v965, %v1544
        %v1573 = vmul.f32 %v966, %v1535
        %v1574 = vmul.f32 %v967, %v1544
        %v1575 = vmul.f32 %v968, %v1535
        %v1576 = vmul.f32 %v969, %v1544
        %v1577 = vmul.f32 %v970, %v1535
        %v1578 = vmul.f32 %v971, %v1544
        %v1579 = vmul.f32 %v972, %v1535
        %v1580 = vmul.f32 %v973, %v1544
        %v1581 = vmul.f32 %v974, %v1535
        %v1582 = vmul.f32 %v975, %v1544
        %v1583 = vmul.f32 %v976, %v1535
        %v1584 = vmul.f32 %v977, %v1544
        %v1585 = vmul.f32 %v978, %v1535
        %v1586 = vmul.f32 %v979, %v1544
        %v1587 = vmul.f32 %v980, %v1535
        %v1588 = vmul.f32 %v981, %v1544
        %v1589 = vmul.f32 %v982, %v1535
        %v1590 = vmul.f32 %v983, %v1544
        %v1591 = vmul.f32 %v984, %v1535
        %v1592 = vmul.f32 %v985, %v1544
        %v1593 = vmul.f32 %v986, %v1535
        %v1594 = vmul.f32 %v987, %v1544
        %v1595 = vmul.f32 %v988, %v1535
        %v1596 = vmul.f32 %v989, %v1544
        %v1597 = vmul.f32 %v990, %v1535
        %v1598 = vmul.f32 %v991, %v1544
        %v1599 = vmul.f32 %v992, %v1535
        %v1600 = vmul.f32 %v993, %v1544
        %1601 = vmatprep.subr.mxu0 %v995
        %1602 = vmatpush1.msra.mxu0 %v994
        %1603 = vmatprep.subr.mxu0 %v997
        %1604 = vmatpush1.msra.mxu0 %v996
        %1605 = vmatprep.subr.mxu0 %v999
        %1606 = vmatpush1.msra.mxu0 %v998
        %1607 = vmatprep.subr.mxu0 %v1001
        %1608 = vmatpush1.msra.mxu0 %v1000
        %1609 = vmatprep.subr.mxu0 %v1003
        %1610 = vmatpush1.msra.mxu0 %v1002
        %1611 = vmatprep.subr.mxu0 %v1005
        %1612 = vmatpush1.msra.mxu0 %v1004
        %1613 = vmatprep.subr.mxu0 %v1007
        %1614 = vmatpush1.msra.mxu0 %v1006
        %1615 = vmatprep.subr.mxu0 %v1009
        %1616 = vmatpush1.msra.mxu0 %v1008
        %1617 = vmatprep.subr.mxu0 %v1011
        %1618 = vmatpush1.msra.mxu0 %v1010
        %1619 = vmatprep.subr.mxu0 %v1013
        %1620 = vmatpush1.msra.mxu0 %v1012
        %1621 = vmatprep.subr.mxu0 %v1015
        %1622 = vmatpush1.msra.mxu0 %v1014
        %1623 = vmatprep.subr.mxu0 %v1017
        %1624 = vmatpush1.msra.mxu0 %v1016
        %1625 = vmatprep.subr.mxu0 %v1019
        %1626 = vmatpush1.msra.mxu0 %v1018
        %1627 = vmatprep.subr.mxu0 %v1021
        %1628 = vmatpush1.msra.mxu0 %v1020
        %1629 = vmatprep.subr.mxu0 %v1023
        %1630 = vmatpush1.msra.mxu0 %v1022
        %1631 = vmatprep.subr.mxu0 %v1025
        %1632 = vmatpush1.msra.mxu0 %v1024
        %1633 = vmatprep.subr.mxu0 %v1027
        %1634 = vmatpush1.msra.mxu0 %v1026
        %1635 = vmatprep.subr.mxu0 %v1029
        %1636 = vmatpush1.msra.mxu0 %v1028
        %1637 = vmatprep.subr.mxu0 %v1031
        %1638 = vmatpush1.msra.mxu0 %v1030
        %1639 = vmatprep.subr.mxu0 %v1033
        %1640 = vmatpush1.msra.mxu0 %v1032
        %1641 = vmatprep.subr.mxu0 %v1035
        %1642 = vmatpush1.msra.mxu0 %v1034
        %1643 = vmatprep.subr.mxu0 %v1037
        %1644 = vmatpush1.msra.mxu0 %v1036
        %1645 = vmatprep.subr.mxu0 %v1039
        %1646 = vmatpush1.msra.mxu0 %v1038
        %1647 = vmatprep.subr.mxu0 %v1041
        %1648 = vmatpush1.msra.mxu0 %v1040
        %1649 = vmatprep.subr.mxu0 %v1043
        %1650 = vmatpush1.msra.mxu0 %v1042
        %1651 = vmatprep.subr.mxu0 %v1045
        %1652 = vmatpush1.msra.mxu0 %v1044
        %1653 = vmatprep.subr.mxu0 %v1047
        %1654 = vmatpush1.msra.mxu0 %v1046
        %1655 = vmatprep.subr.mxu0 %v1049
        %1656 = vmatpush1.msra.mxu0 %v1048
        %1657 = vmatprep.subr.mxu0 %v1051
        %1658 = vmatpush1.msra.mxu0 %v1050
        %1659 = vmatprep.subr.mxu0 %v1053
        %1660 = vmatpush1.msra.mxu0 %v1052
        %1661 = vmatprep.subr.mxu0 %v1055
        %1662 = vmatpush1.msra.mxu0 %v1054
        %1663 = vmatprep.subr.mxu0 %v1057
        %1664 = vmatpush1.msra.mxu0 %v1056
        %1665 = vmatprep.mubr.f32.mxu0 %v1546
        %1666 = vmatmul.mubr.f32.gmra.mrb[0].mxu0 %v1545
        %v1667 = vpop.f32.mrb[0].mxu0
        %v1668 = vadd.f32 %v1196, %v1667
        %v1669 = vpop.f32.mrb[0].mxu0
        %v1670 = vadd.f32 %v1196, %v1669
        %1671 = vmatprep.mubr.f32.mxu0 %v1548
        %1672 = vmatmul.mubr.f32.gmra.mrb[0].mxu0 %v1547
        %v1673 = vpop.f32.mrb[0].mxu0
        %v1674 = vadd.f32 %v1196, %v1673
        %v1675 = vpop.f32.mrb[0].mxu0
        %v1676 = vadd.f32 %v1196, %v1675
        %1677 = vmatprep.mubr.f32.mxu0 %v1550
        %1678 = vmatmul.mubr.f32.gmra.mrb[0].mxu0 %v1549
        %v1679 = vpop.f32.mrb[0].mxu0
        %v1680 = vadd.f32 %v1196, %v1679
        %v1681 = vpop.f32.mrb[0].mxu0
        %v1682 = vadd.f32 %v1196, %v1681
        %1683 = vmatprep.mubr.f32.mxu0 %v1552
        %1684 = vmatmul.mubr.f32.gmra.mrb[0].mxu0 %v1551
        %v1685 = vpop.f32.mrb[0].mxu0
        %v1686 = vadd.f32 %v1196, %v1685
        %v1687 = vpop.f32.mrb[0].mxu0
        %v1688 = vadd.f32 %v1196, %v1687
        %1689 = vmatprep.mubr.f32.mxu0 %v1554
        %1690 = vmatmul.mubr.f32.gmra.mrb[0].mxu0 %v1553
        %v1691 = vpop.f32.mrb[0].mxu0
        %v1692 = vadd.f32 %v1196, %v1691
        %v1693 = vpop.f32.mrb[0].mxu0
        %v1694 = vadd.f32 %v1196, %v1693
        %1695 = vmatprep.mubr.f32.mxu0 %v1556
        %1696 = vmatmul.mubr.f32.gmra.mrb[0].mxu0 %v1555
        %v1697 = vpop.f32.mrb[0].mxu0
        %v1698 = vadd.f32 %v1196, %v1697
        %v1699 = vpop.f32.mrb[0].mxu0
        %v1700 = vadd.f32 %v1196, %v1699
        %1701 = vmatprep.mubr.f32.mxu0 %v1558
        %1702 = vmatmul.mubr.f32.gmra.mrb[0].mxu0 %v1557
        %v1703 = vpop.f32.mrb[0].mxu0
        %v1704 = vadd.f32 %v1196, %v1703
        %v1705 = vpop.f32.mrb[0].mxu0
        %v1706 = vadd.f32 %v1196, %v1705
        %1707 = vmatprep.mubr.f32.mxu0 %v1560
        %1708 = vmatmul.mubr.f32.gmra.mrb[0].mxu0 %v1559
        %v1709 = vpop.f32.mrb[0].mxu0
        %v1710 = vadd.f32 %v1196, %v1709
        %v1711 = vpop.f32.mrb[0].mxu0
        %v1712 = vadd.f32 %v1196, %v1711
        %1713 = vmatprep.mubr.f32.mxu0 %v1562
        %1714 = vmatmul.mubr.f32.gmra.mrb[0].mxu0 %v1561
        %v1715 = vpop.f32.mrb[0].mxu0
        %v1716 = vadd.f32 %v1196, %v1715
        %v1717 = vpop.f32.mrb[0].mxu0
        %v1718 = vadd.f32 %v1196, %v1717
        %1719 = vmatprep.mubr.f32.mxu0 %v1564
        %1720 = vmatmul.mubr.f32.gmra.mrb[0].mxu0 %v1563
        %v1721 = vpop.f32.mrb[0].mxu0
        %v1722 = vadd.f32 %v1196, %v1721
        %v1723 = vpop.f32.mrb[0].mxu0
        %v1724 = vadd.f32 %v1196, %v1723
        %1725 = vmatprep.mubr.f32.mxu0 %v1566
        %1726 = vmatmul.mubr.f32.gmra.mrb[0].mxu0 %v1565
        %v1727 = vpop.f32.mrb[0].mxu0
        %v1728 = vadd.f32 %v1196, %v1727
        %v1729 = vpop.f32.mrb[0].mxu0
        %v1730 = vadd.f32 %v1196, %v1729
        %1731 = vmatprep.mubr.f32.mxu0 %v1568
        %1732 = vmatmul.mubr.f32.gmra.mrb[0].mxu0 %v1567
        %v1733 = vpop.f32.mrb[0].mxu0
        %v1734 = vadd.f32 %v1196, %v1733
        %v1735 = vpop.f32.mrb[0].mxu0
        %v1736 = vadd.f32 %v1196, %v1735
        %1737 = vmatprep.mubr.f32.mxu0 %v1570
        %1738 = vmatmul.mubr.f32.gmra.mrb[0].mxu0 %v1569
        %v1739 = vpop.f32.mrb[0].mxu0
        %v1740 = vadd.f32 %v1196, %v1739
        %v1741 = vpop.f32.mrb[0].mxu0
        %v1742 = vadd.f32 %v1196, %v1741
        %1743 = vmatprep.mubr.f32.mxu0 %v1572
        %1744 = vmatmul.mubr.f32.gmra.mrb[0].mxu0 %v1571
        %v1745 = vpop.f32.mrb[0].mxu0
        %v1746 = vadd.f32 %v1196, %v1745
        %v1747 = vpop.f32.mrb[0].mxu0
        %v1748 = vadd.f32 %v1196, %v1747
        %1749 = vmatprep.mubr.f32.mxu0 %v1574
        %1750 = vmatmul.mubr.f32.gmra.mrb[0].mxu0 %v1573
        %v1751 = vpop.f32.mrb[0].mxu0
        %v1752 = vadd.f32 %v1196, %v1751
        %v1753 = vpop.f32.mrb[0].mxu0
        %v1754 = vadd.f32 %v1196, %v1753
        %1755 = vmatprep.mubr.f32.mxu0 %v1576
        %1756 = vmatmul.mubr.f32.gmra.mrb[0].mxu0 %v1575
        %v1757 = vpop.f32.mrb[0].mxu0
        %v1758 = vadd.f32 %v1196, %v1757
        %v1759 = vpop.f32.mrb[0].mxu0
        %v1760 = vadd.f32 %v1196, %v1759
        %1761 = vmatprep.mubr.f32.mxu0 %v1578
        %1762 = vmatmul.mubr.f32.gmra.mrb[0].mxu0 %v1577
        %v1763 = vpop.f32.mrb[0].mxu0
        %v1764 = vadd.f32 %v1196, %v1763
        %v1765 = vpop.f32.mrb[0].mxu0
        %v1766 = vadd.f32 %v1196, %v1765
        %1767 = vmatprep.mubr.f32.mxu0 %v1580
        %1768 = vmatmul.mubr.f32.gmra.mrb[0].mxu0 %v1579
        %v1769 = vpop.f32.mrb[0].mxu0
        %v1770 = vadd.f32 %v1196, %v1769
        %v1771 = vpop.f32.mrb[0].mxu0
        %v1772 = vadd.f32 %v1196, %v1771
        %1773 = vmatprep.mubr.f32.mxu0 %v1582
        %1774 = vmatmul.mubr.f32.gmra.mrb[0].mxu0 %v1581
        %v1775 = vpop.f32.mrb[0].mxu0
        %v1776 = vadd.f32 %v1196, %v1775
        %v1777 = vpop.f32.mrb[0].mxu0
        %v1778 = vadd.f32 %v1196, %v1777
        %1779 = vmatprep.mubr.f32.mxu0 %v1584
        %1780 = vmatmul.mubr.f32.gmra.mrb[0].mxu0 %v1583
        %v1781 = vpop.f32.mrb[0].mxu0
        %v1782 = vadd.f32 %v1196, %v1781
        %v1783 = vpop.f32.mrb[0].mxu0
        %v1784 = vadd.f32 %v1196, %v1783
        %1785 = vmatprep.mubr.f32.mxu0 %v1586
        %1786 = vmatmul.mubr.f32.gmra.mrb[0].mxu0 %v1585
        %v1787 = vpop.f32.mrb[0].mxu0
        %v1788 = vadd.f32 %v1196, %v1787
        %v1789 = vpop.f32.mrb[0].mxu0
        %v1790 = vadd.f32 %v1196, %v1789
        %1791 = vmatprep.mubr.f32.mxu0 %v1588
        %1792 = vmatmul.mubr.f32.gmra.mrb[0].mxu0 %v1587
        %v1793 = vpop.f32.mrb[0].mxu0
        %v1794 = vadd.f32 %v1196, %v1793
        %v1795 = vpop.f32.mrb[0].mxu0
        %v1796 = vadd.f32 %v1196, %v1795
        %1797 = vmatprep.mubr.f32.mxu0 %v1590
        %1798 = vmatmul.mubr.f32.gmra.mrb[0].mxu0 %v1589
        %v1799 = vpop.f32.mrb[0].mxu0
        %v1800 = vadd.f32 %v1196, %v1799
        %v1801 = vpop.f32.mrb[0].mxu0
        %v1802 = vadd.f32 %v1196, %v1801
        %1803 = vmatprep.mubr.f32.mxu0 %v1592
        %1804 = vmatmul.mubr.f32.gmra.mrb[0].mxu0 %v1591
        %v1805 = vpop.f32.mrb[0].mxu0
        %v1806 = vadd.f32 %v1196, %v1805
        %v1807 = vpop.f32.mrb[0].mxu0
        %v1808 = vadd.f32 %v1196, %v1807
        %1809 = vmatprep.mubr.f32.mxu0 %v1594
        %1810 = vmatmul.mubr.f32.gmra.mrb[0].mxu0 %v1593
        %v1811 = vpop.f32.mrb[0].mxu0
        %v1812 = vadd.f32 %v1196, %v1811
        %v1813 = vpop.f32.mrb[0].mxu0
        %v1814 = vadd.f32 %v1196, %v1813
        %1815 = vmatprep.mubr.f32.mxu0 %v1596
        %1816 = vmatmul.mubr.f32.gmra.mrb[0].mxu0 %v1595
        %v1817 = vpop.f32.mrb[0].mxu0
        %v1818 = vadd.f32 %v1196, %v1817
        %v1819 = vpop.f32.mrb[0].mxu0
        %v1820 = vadd.f32 %v1196, %v1819
        %1821 = vmatprep.mubr.f32.mxu0 %v1598
        %1822 = vmatmul.mubr.f32.gmra.mrb[0].mxu0 %v1597
        %v1823 = vpop.f32.mrb[0].mxu0
        %v1824 = vadd.f32 %v1196, %v1823
        %v1825 = vpop.f32.mrb[0].mxu0
        %v1826 = vadd.f32 %v1196, %v1825
        %1827 = vmatprep.mubr.f32.mxu0 %v1600
        %1828 = vmatmul.mubr.f32.gmra.mrb[0].mxu0 %v1599
        %v1829 = vpop.f32.mrb[0].mxu0
        %v1830 = vadd.f32 %v1196, %v1829
        %v1831 = vpop.f32.mrb[0].mxu0
        %v1832 = vadd.f32 %v1196, %v1831
        %1833 = vdwg.mxu0
        %s1834 = scalar_lea.vmem %s556, 448 [#allocation20]
        %1835 = vst [vmem:[%s1834] sm:$0xff] %v1668
        %1836 = vst.msk [vmem:[%s1834 + $0x8] sm:$0xff] %vm1431, %v1670
        %1837 = vst [vmem:[%s1834 + $0x10] sm:$0xff] %v1674
        %1838 = vst.msk [vmem:[%s1834 + $0x18] sm:$0xff] %vm1431, %v1676
        %1839 = vst [vmem:[%s1834 + $0x20] sm:$0xff] %v1680
        %1840 = vst.msk [vmem:[%s1834 + $0x28] sm:$0xff] %vm1431, %v1682
        %1841 = vst [vmem:[%s1834 + $0x30] sm:$0xff] %v1686
        %1842 = vst.msk [vmem:[%s1834 + $0x38] sm:$0xff] %vm1431, %v1688
        %1843 = vst [vmem:[%s1834 + $0x40] sm:$0xff] %v1692
        %1844 = vst.msk [vmem:[%s1834 + $0x48] sm:$0xff] %vm1431, %v1694
        %1845 = vst [vmem:[%s1834 + $0x50] sm:$0xff] %v1698
        %1846 = vst.msk [vmem:[%s1834 + $0x58] sm:$0xff] %vm1431, %v1700
        %1847 = vst [vmem:[%s1834 + $0x60] sm:$0xff] %v1704
        %1848 = vst.msk [vmem:[%s1834 + $0x68] sm:$0xff] %vm1431, %v1706
        %1849 = vst [vmem:[%s1834 + $0x70] sm:$0xff] %v1710
        %1850 = vst.msk [vmem:[%s1834 + $0x78] sm:$0xff] %vm1431, %v1712
        %1851 = vst [vmem:[%s1834 + $0x80] sm:$0xff] %v1716
        %1852 = vst.msk [vmem:[%s1834 + $0x88] sm:$0xff] %vm1431, %v1718
        %1853 = vst [vmem:[%s1834 + $0x90] sm:$0xff] %v1722
        %1854 = vst.msk [vmem:[%s1834 + $0x98] sm:$0xff] %vm1431, %v1724
        %1855 = vst [vmem:[%s1834 + $0xa0] sm:$0xff] %v1728
        %1856 = vst.msk [vmem:[%s1834 + $0xa8] sm:$0xff] %vm1431, %v1730
        %1857 = vst [vmem:[%s1834 + $0xb0] sm:$0xff] %v1734
        %1858 = vst.msk [vmem:[%s1834 + $0xb8] sm:$0xff] %vm1431, %v1736
        %1859 = vst [vmem:[%s1834 + $0xc0] sm:$0xff] %v1740
        %1860 = vst.msk [vmem:[%s1834 + $0xc8] sm:$0xff] %vm1431, %v1742
        %1861 = vst [vmem:[%s1834 + $0xd0] sm:$0xff] %v1746
        %1862 = vst.msk [vmem:[%s1834 + $0xd8] sm:$0xff] %vm1431, %v1748
        %1863 = vst [vmem:[%s1834 + $0xe0] sm:$0xff] %v1752
        %1864 = vst.msk [vmem:[%s1834 + $0xe8] sm:$0xff] %vm1431, %v1754
        %1865 = vst [vmem:[%s1834 + $0xf0] sm:$0xff] %v1758
        %1866 = vst.msk [vmem:[%s1834 + $0xf8] sm:$0xff] %vm1431, %v1760
        %1867 = vst [vmem:[%s1834 + $0x100] sm:$0xff] %v1764
        %1868 = vst.msk [vmem:[%s1834 + $0x108] sm:$0xff] %vm1431, %v1766
        %1869 = vst [vmem:[%s1834 + $0x110] sm:$0xff] %v1770
        %1870 = vst.msk [vmem:[%s1834 + $0x118] sm:$0xff] %vm1431, %v1772
        %1871 = vst [vmem:[%s1834 + $0x120] sm:$0xff] %v1776
        %1872 = vst.msk [vmem:[%s1834 + $0x128] sm:$0xff] %vm1431, %v1778
        %1873 = vst [vmem:[%s1834 + $0x130] sm:$0xff] %v1782
        %1874 = vst.msk [vmem:[%s1834 + $0x138] sm:$0xff] %vm1431, %v1784
        %1875 = vst [vmem:[%s1834 + $0x140] sm:$0xff] %v1788
        %1876 = vst.msk [vmem:[%s1834 + $0x148] sm:$0xff] %vm1431, %v1790
        %1877 = vst [vmem:[%s1834 + $0x150] sm:$0xff] %v1794
        %1878 = vst.msk [vmem:[%s1834 + $0x158] sm:$0xff] %vm1431, %v1796
        %1879 = vst [vmem:[%s1834 + $0x160] sm:$0xff] %v1800
        %1880 = vst.msk [vmem:[%s1834 + $0x168] sm:$0xff] %vm1431, %v1802
        %1881 = vst [vmem:[%s1834 + $0x170] sm:$0xff] %v1806
        %1882 = vst.msk [vmem:[%s1834 + $0x178] sm:$0xff] %vm1431, %v1808
        %1883 = vst [vmem:[%s1834 + $0x180] sm:$0xff] %v1812
        %1884 = vst.msk [vmem:[%s1834 + $0x188] sm:$0xff] %vm1431, %v1814
        %1885 = vst [vmem:[%s1834 + $0x190] sm:$0xff] %v1818
        %1886 = vst.msk [vmem:[%s1834 + $0x198] sm:$0xff] %vm1431, %v1820
        %1887 = vst [vmem:[%s1834 + $0x1a0] sm:$0xff] %v1824
        %1888 = vst.msk [vmem:[%s1834 + $0x1a8] sm:$0xff] %vm1431, %v1826
        %1889 = vst [vmem:[%s1834 + $0x1b0] sm:$0xff] %v1830
        %1890 = vst.msk [vmem:[%s1834 + $0x1b8] sm:$0xff] %vm1431, %v1832
        %s1891 = sand.u32 %s285, 1
        %s1892 = scalar_lea.sflag [#allocation5], %s1891
        %s1893 = sand.u32 %s285, 1
        %s1894 = smul.addr %s1893, 896
        %s1895 = scalar_lea.vmem [#allocation20], %s1894
        // Predicated region
        $region105: #{phrase_guided_segmentation.1} parent=63 // pred_check
          %p1896 = pneg %p295
        $region106: #{phrase_guided_segmentation.1} parent=63 // pred_check_branch
          %1898 = sbr.rel (%p1896) target = $region108
        $region107: #{phrase_guided_segmentation.1} parent=63 // pred_region
          %s1899 = smul.u32 2, %s36
          %s1901 = ssub.s32 14336, 14336
          %1902 = vsyncadd %s1892, %s1901
          %s1903 = smul.addr %s1899, 56
          %s1904 = smul.addr %s1903, 128
          %s1905 = scalar_lea.hbm %s11, %s1904
          %s1906 = sshll.u32 %s1895, 4
          %s1907 = int_to_ptr.vmem [resolvable:$true] %s1906
          %1912 = dma.vmem_to_hbm [thread:$0]  %s1907, 14336, %s1905, %s1892, 256, 256, 16
        $region108: #{phrase_guided_segmentation.1} parent=63 // pred_fallthru
          _
      $region64: #{phrase_guided_segmentation.1} parent=5 // pred_fallthru
        _
      %p1913 = scmp.le.s32.totalorder 2, %s31
      // Predicated region
      $region109: #{phrase_guided_segmentation.1} parent=5 // pred_check
        %p1914 = pneg %p1913
      $region110: #{phrase_guided_segmentation.1} parent=5 // pred_check_branch
        %1916 = sbr.rel (%p1914) target = $region112
      $region111: #{phrase_guided_segmentation.1} parent=5 // pred_region
        %s1917 = ssub.s32 %s31, 2
        // Predicated region
        $region113: #{phrase_guided_segmentation.1} parent=111 // pred_check
          %p1918 = pneg %p301
        $region114: #{phrase_guided_segmentation.1} parent=111 // pred_check_branch
          %1920 = sbr.rel (%p1918) target = $region116
        $region115: #{phrase_guided_segmentation.1} parent=111 // pred_region
          %s1921 = sand.u32 %s286, 1
          %s1922 = scalar_lea.sflag [#allocation5], %s1921
          %s1923 = sand.u32 %s286, 1
          %s1924 = smul.addr %s1923, 896
          %s1925 = scalar_lea.vmem [#allocation20], %s1924
          %1926 = dma.done %s1922, 14336
        $region116: #{phrase_guided_segmentation.1} parent=111 // pred_fallthru
          _
      $region112: #{phrase_guided_segmentation.1} parent=5 // pred_fallthru
        _
    $region6: #{phrase_guided_segmentation.1} parent=1 // loop_footer
      %s35 = sadd.s32 1, %s31
    $region7: #{phrase_guided_segmentation.1} parent=1 // loop_footer_branch
      %30 = sbr.rel target = $region3
    $region8: #{phrase_guided_segmentation.1} parent=1 // loop_exit
      _
    %1927 = vsyncpa [#allocation4], 1
    %s1928 = scalar_lea.sflag [#allocation4], 1
    %1929 = vsyncpa %s1928, 1
    %1930 = vsyncpa [#allocation7], 1
    %s1931 = scalar_lea.sflag [#allocation7], 1
    %1932 = vsyncpa %s1931, 1
    %1933 = vsyncpa [#allocation10], 1
    %1934 = vsyncpa [#allocation13], 1
    %1935 = vsyncpa [#allocation16], 1
    %1936 = vsyncpa [#allocation19], 1
    %1937 = vsyncpa [#allocation5], 1
    %s1938 = scalar_lea.sflag [#allocation5], 1
    %1939 = vsyncpa %s1938, 1

</llo_original>
